<compile_context>
chip_gen: v7x
topology: tpu7x:2x2x1
jax: 0.10.0
libtpu: 0.0.40
codegen_flags: <defaults>
</compile_context>

<pallas_src>
import jax
import jax.numpy as jnp
from jax.experimental import pallas as pl
from jax.experimental.pallas import tpu as pltpu


# ----------------------------------------------------------------------------
# Wrapper-side parameter packing: one lane-dense slab + per-layer row offsets.
# ----------------------------------------------------------------------------
def build_param_slab(layer_params, k, c0):
    """Pack every conv tap (and fused downsample / bias) into one (R, 128k) slab.

    Per conv we store k row-blocks, one per tap j:
      block_j[:, :c_in]  = w[:, :, j]         (conv rows)
      block_{k-1}[c_out:, :c_in] = wds        (fused 1x1 downsample rows, if any)
      block_0[:, c_in]   = bias               (b1 [+ bds for downsample rows])
    Each block starts at lane 0 and its row offset is 8-aligned.
    """
    blocks = []
    layer_infos = []
    c_in = c0

    def add_block(b):
        blocks.append(b)
        return len(blocks) - 1

    for p in layer_params:
        c_out = p["w1"].shape[0]
        has_ds = "wds" in p
        rows1 = 2 * c_out if has_ds else c_out
        info = dict(c_in=c_in, c_out=c_out, has_ds=has_ds, conv1=[], conv2=[])

        # conv1 taps (+ downsample folded into tap k-1, biases in tap 0)
        for j in range(k):
            blk = jnp.zeros((rows1, c_in + 1), jnp.float32)
            blk = blk.at[:c_out, :c_in].set(p["w1"][:, :, j])
            if has_ds and j == k - 1:
                blk = blk.at[c_out:, :c_in].set(p["wds"])
            if j == 0:
                blk = blk.at[:c_out, c_in].set(p["b1"][:, 0])
                if has_ds:
                    blk = blk.at[c_out:, c_in].set(p["bds"][:, 0])
            info["conv1"].append(add_block(blk))

        # conv2 taps (bias in tap 0)
        for j in range(k):
            blk = jnp.zeros((c_out, c_out + 1), jnp.float32)
            blk = blk.at[:, :c_out].set(p["w2"][:, :, j])
            if j == 0:
                blk = blk.at[:, c_out].set(p["b2"][:, 0])
            info["conv2"].append(add_block(blk))

        layer_infos.append(info)
        c_in = c_out

    max_w = max(b.shape[1] for b in blocks)
    slab_w = ((max_w + 127) // 128) * 128          # lane-dense width
    row_off, padded, r = [], [], 0
    for b in blocks:
        row_off.append(r)
        rows_p = ((b.shape[0] + 7) // 8) * 8       # sublane-aligned offsets
        pb = jnp.zeros((rows_p, slab_w), jnp.float32)
        pb = pb.at[:b.shape[0], :b.shape[1]].set(b)
        padded.append(pb)
        r += rows_p
    slab = jnp.concatenate(padded, axis=0)         # (total_rows, slab_w)

    for info in layer_infos:
        info["conv1"] = [row_off[i] for i in info["conv1"]]
        info["conv2"] = [row_off[i] for i in info["conv2"]]
    return slab, layer_infos


# ----------------------------------------------------------------------------
# Fused kernel factory: whole TemporalBlock stack, nb batch elements per step.
# ----------------------------------------------------------------------------
def make_fused_tcn_kernel(layer_infos, k, L, c_max, pad_max, nb):
    def kernel(x_ref, slab_ref, o_ref, pad_buf):
        # Zero the causal left-pad region; activations only ever write columns
        # [pad_max:), so the pad stays zero for every layer / tap / batch elem.
        pad_buf[:, :pad_max] = jnp.zeros((nb * c_max, pad_max), jnp.float32)

        def conv(base, c_in_c, rows, d, tap_offs):
            # y = sum_j W_j @ shift(x, (k-1-j)*d) + b  — k tiny MXU matmuls,
            # no concatenates; shifted views are static slices of the scratch.
            acc = None
            for j in range(k):
                s = (k - 1 - j) * d
                xv = pad_buf[base:base + c_in_c, pad_max - s:pad_max - s + L]
                wj = slab_ref[tap_offs[j]:tap_offs[j] + rows, :c_in_c]
                t = jnp.dot(wj, xv, preferred_element_type=jnp.float32)
                acc = t if acc is None else acc + t
            bias = slab_ref[tap_offs[0]:tap_offs[0] + rows, c_in_c:c_in_c + 1]
            return acc + bias

        for bi in range(nb):                         # independent batch chains
            base = bi * c_max
            h = x_ref[bi].astype(jnp.float32)        # (C0, L), VMEM/vreg resident
            for i, info in enumerate(layer_infos):
                d = 2 ** i
                c_in, c_out = info["c_in"], info["c_out"]
                has_ds = info["has_ds"]
                rows1 = 2 * c_out if has_ds else c_out

                # conv1 (+ fused 1x1 downsample rows) -> chomp -> relu
                pad_buf[base:base + c_in, pad_max:pad_max + L] = h
                y = conv(base, c_in, rows1, d, info["conv1"])
                h1 = jnp.maximum(y[:c_out], 0.0)
                res = y[c_out:] if has_ds else h

                # conv2 -> chomp -> relu  (dropout: eval mode -> identity)
                pad_buf[base:base + c_out, pad_max:pad_max + L] = h1
                y2 = conv(base, c_out, c_out, d, info["conv2"])

                # residual add + final relu; block output stays on-chip
                h = jnp.maximum(jnp.maximum(y2, 0.0) + res, 0.0)

            o_ref[bi] = h.astype(o_ref.dtype)

    return kernel


# ----------------------------------------------------------------------------
# Batch strategy: v7x (2 TCs/chip) splits batch across cores via the grid;
# single-TC v5e/v6e fold the small batch into one grid step.
# ----------------------------------------------------------------------------
def _pick_block_batch(B):
    if B <= 1:
        return 1
    try:
        kind = jax.devices()[0].device_kind.lower()
    except Exception:
        kind = ""
    if "7" in kind:            # v7x-like: 2 TensorCores per chip
        return 1               # grid=(B,) "parallel" -> both cores busy
    return B if B <= 4 else 1  # single-TC: whole batch in one grid step


# ----------------------------------------------------------------------------
# Wrapper: one pallas_call for the whole TCN stack.
# ----------------------------------------------------------------------------
def tcn_forward(x, layer_params, kernel_size):
    """x: (B, C0, L)  ->  (B, C_last, L)   (whole TemporalBlock stack, fused)"""
    B, C0, L = x.shape
    k = kernel_size

    slab, infos = build_param_slab(layer_params, k, C0)
    c_last = infos[-1]["c_out"]
    c_max = max([C0] + [m["c_out"] for m in infos])
    pad_max = (k - 1) * (2 ** (len(infos) - 1))

    nb = _pick_block_batch(B)
    grid = (B // nb,)

    kernel = make_fused_tcn_kernel(infos, k, L, c_max, pad_max, nb)

    # Accurate (tiny) cost estimate so XLA doesn't over-schedule around this call.
    flops = 0
    for m in infos:
        rows1 = 2 * m["c_out"] if m["has_ds"] else m["c_out"]
        flops += 2 * rows1 * k * m["c_in"] * L          # conv1 (+ fused ds)
        flops += 2 * m["c_out"] * k * m["c_out"] * L    # conv2
    flops *= B
    bytes_accessed = 4 * (x.size + B * c_last * L + int(slab.size))

    return pl.pallas_call(
        kernel,
        out_shape=jax.ShapeDtypeStruct((B, c_last, L), x.dtype),
        grid_spec=pltpu.PrefetchScalarGridSpec(
            num_scalar_prefetch=0,
            grid=grid,
            in_specs=[
                pl.BlockSpec((nb, C0, L), lambda b: (b, 0, 0)),
                # single parameter slab; block index never changes -> fetched once
                pl.BlockSpec(slab.shape, lambda b: (0, 0)),
            ],
            out_specs=pl.BlockSpec((nb, c_last, L), lambda b: (b, 0, 0)),
            scratch_shapes=[pltpu.VMEM((nb * c_max, pad_max + L), jnp.float32)],
        ),
        compiler_params=pltpu.CompilerParams(
            dimension_semantics=("parallel",)),
        cost_estimate=pl.CostEstimate(
            flops=int(flops), transcendentals=0, bytes_accessed=int(bytes_accessed)),
    )(x, slab)


# ----------------------------------------------------------------------------
# Model wrapper (forecast task: return tcn(x_enc)[:, -pred_len:, :])
# ----------------------------------------------------------------------------
def model_forward(x_enc, layer_params, kernel_size, pred_len):
    dec_out = tcn_forward(x_enc, layer_params, kernel_size)   # (B, pred_len, enc_in)
    return dec_out[:, -pred_len:, :]


# ----------------------------------------------------------------------------
# Deterministic parameter setup (plain-JAX glue), weight_norm folded in.
# ----------------------------------------------------------------------------
def make_wn_conv(key, c_out, c_in, k):
    kv, kg, kb = jax.random.split(key, 3)
    v = jax.random.normal(kv, (c_out, c_in, k), jnp.float32) * 0.05
    g = jax.random.uniform(kg, (c_out, 1, 1), jnp.float32, 0.5, 1.5)
    norm = jnp.sqrt(jnp.sum(v * v, axis=(1, 2), keepdims=True))
    w = g * v / norm                               # weight_norm: w = g * v / ||v||
    b = jax.random.normal(kb, (c_out, 1), jnp.float32) * 0.05
    return w, b


def init_params(key, seq_len, pred_len, e_layers, kernel_size):
    layers = []
    num_channels = [pred_len] * e_layers
    for i in range(e_layers):
        c_in = seq_len if i == 0 else num_channels[i - 1]
        c_out = num_channels[i]
        key, k1, k2, k3 = jax.random.split(key, 4)
        w1, b1 = make_wn_conv(k1, c_out, c_in, kernel_size)
        w2, b2 = make_wn_conv(k2, c_out, c_out, kernel_size)
        p = {"w1": w1, "b1": b1, "w2": w2, "b2": b2}
        if c_in != c_out:                          # downsample 1x1 conv
            kw, kb2 = jax.random.split(k3)
            p["wds"] = jax.random.normal(kw, (c_out, c_in), jnp.float32) * 0.01
            p["bds"] = jax.random.normal(kb2, (c_out, 1), jnp.float32) * 0.01
        layers.append(p)
    return layers


# ----------------------------------------------------------------------------
# Pure-JAX reference (for a correctness sanity check)
# ----------------------------------------------------------------------------
def _ref_causal_conv(x, w, b, d):
    k = w.shape[-1]
    p = (k - 1) * d
    y = jax.lax.conv_general_dilated(
        x, w, window_strides=(1,), padding=[(p, 0)], rhs_dilation=(d,),
        dimension_numbers=("NCH", "OIH", "NCH"))
    return y + b[None, :, :]


def _ref_tblock(x, params, d):
    h = jnp.maximum(_ref_causal_conv(x, params["w1"], params["b1"], d), 0.0)
    h = jnp.maximum(_ref_causal_conv(h, params["w2"], params["b2"], d), 0.0)
    if "wds" in params:
        res = jnp.einsum("oc,bcl->bol", params["wds"], x) + params["bds"][None, :, :]
    else:
        res = x
    return jnp.maximum(h + res, 0.0)


# ----------------------------------------------------------------------------
if __name__ == "__main__":
    # configs: task_name='long_term_forecast', seq_len=8, pred_len=16,
    #          e_layers=2, moving_avg(kernel_size)=3, enc_in=16, dropout=0.2
    B, seq_len, pred_len, e_layers, enc_in, ksize = 2, 8, 16, 2, 16, 3

    key = jax.random.PRNGKey(0)
    kx, kp = jax.random.split(key)
    # x_enc: (B, seq_len, enc_in) -- fed straight into Conv1d as NCL
    x_enc = jax.random.normal(kx, (B, seq_len, enc_in), jnp.float32)
    params = init_params(kp, seq_len, pred_len, e_layers, ksize)

    out = model_forward(x_enc, params, ksize, pred_len)
    out = jax.block_until_ready(out)

    # sanity check against pure-JAX reference
    ref = x_enc
    for i, p in enumerate(params):
        ref = _ref_tblock(ref, p, 2 ** i)
    ref = ref[:, -pred_len:, :]

    assert out.shape == (B, pred_len, enc_in), out.shape
    assert jnp.allclose(out, ref, rtol=1e-2, atol=1e-2), \
        float(jnp.max(jnp.abs(out - ref)))
    print("KERNEL_OK")
</pallas_src>

<mosaic_0001>
module attributes {stable_mosaic.version = 11 : i64} {
  func.func @kernel(%arg0: i32, %arg1: memref<2x8x16xf32, #tpu.memory_space<vmem>>, %arg2: memref<240x128xf32, #tpu.memory_space<vmem>>, %arg3: memref<2x16x16xf32, #tpu.memory_space<vmem>>, %arg4: memref<32x20xf32, #tpu.memory_space<vmem>>) attributes {dimension_semantics = [#tpu.dimension_semantics<parallel>], iteration_bounds = array<i64: 1>, scalar_prefetch = 0 : i64, scratch_operands = 1 : i64, tpu.core_type = #tpu.core_type<tc>, window_params = [{transform_indices = @transform_0, window_bounds = array<i64: 2, 8, 16>}, {pipeline_mode = #tpu.pipeline_mode<synchronous>, transform_indices = @transform_1, window_bounds = array<i64: 240, 128>}, {transform_indices = @transform_2, window_bounds = array<i64: 2, 16, 16>}]} {
    %cst = arith.constant 0.000000e+00 : f32
    %0 = vector.broadcast %cst : f32 to vector<32x4xf32>
    %c0 = arith.constant 0 : index
    %c0_0 = arith.constant 0 : index
    %1 = vector.load %arg4[%c0, %c0_0] : memref<32x20xf32, #tpu.memory_space<vmem>>, vector<32x4xf32>
    tpu.vector_store %arg4[%c0, %c0_0], %0 {strides = array<i32>} : memref<32x20xf32, #tpu.memory_space<vmem>>, vector<32x4xf32>,
    %c0_1 = arith.constant 0 : index
    %c0_2 = arith.constant 0 : index
    %c0_3 = arith.constant 0 : index
    %2 = vector.load %arg1[%c0_1, %c0_2, %c0_3] : memref<2x8x16xf32, #tpu.memory_space<vmem>>, vector<1x8x16xf32>
    %3 = vector.shape_cast %2 : vector<1x8x16xf32> to vector<8x16xf32>
    %c0_4 = arith.constant 0 : index
    %c4 = arith.constant 4 : index
    %4 = vector.load %arg4[%c0_4, %c4] : memref<32x20xf32, #tpu.memory_space<vmem>>, vector<8x16xf32>
    tpu.vector_store %arg4[%c0_4, %c4], %3 {strides = array<i32>} : memref<32x20xf32, #tpu.memory_space<vmem>>, vector<8x16xf32>,
    %c0_5 = arith.constant 0 : index
    %c2 = arith.constant 2 : index
    %5 = vector.load %arg4[%c0_5, %c2] : memref<32x20xf32, #tpu.memory_space<vmem>>, vector<8x16xf32>
    %c0_6 = arith.constant 0 : index
    %c0_7 = arith.constant 0 : index
    %6 = vector.load %arg2[%c0_6, %c0_7] : memref<240x128xf32, #tpu.memory_space<vmem>>, vector<32x8xf32>
    %cst_8 = arith.constant dense<0.000000e+00> : vector<32x16xf32>
    %7 = tpu.matmul %6, %5, %cst_8 {dimension_numbers = #tpu.dot_dimension_numbers<[1], [0], [0], [1], [0, 0, 1, 1], [], []>} : vector<32x8xf32>, vector<8x16xf32>, vector<32x16xf32> -> vector<32x16xf32>
    %c0_9 = arith.constant 0 : index
    %c3 = arith.constant 3 : index
    %8 = vector.load %arg4[%c0_9, %c3] : memref<32x20xf32, #tpu.memory_space<vmem>>, vector<8x16xf32>
    %c32 = arith.constant 32 : index
    %c0_10 = arith.constant 0 : index
    %9 = vector.load %arg2[%c32, %c0_10] : memref<240x128xf32, #tpu.memory_space<vmem>>, vector<32x8xf32>
    %cst_11 = arith.constant dense<0.000000e+00> : vector<32x16xf32>
    %10 = tpu.matmul %9, %8, %cst_11 {dimension_numbers = #tpu.dot_dimension_numbers<[1], [0], [0], [1], [0, 0, 1, 1], [], []>} : vector<32x8xf32>, vector<8x16xf32>, vector<32x16xf32> -> vector<32x16xf32>
    %11 = arith.addf %7, %10 : vector<32x16xf32>
    %c0_12 = arith.constant 0 : index
    %c4_13 = arith.constant 4 : index
    %12 = vector.load %arg4[%c0_12, %c4_13] : memref<32x20xf32, #tpu.memory_space<vmem>>, vector<8x16xf32>
    %c64 = arith.constant 64 : index
    %c0_14 = arith.constant 0 : index
    %13 = vector.load %arg2[%c64, %c0_14] : memref<240x128xf32, #tpu.memory_space<vmem>>, vector<32x8xf32>
    %cst_15 = arith.constant dense<0.000000e+00> : vector<32x16xf32>
    %14 = tpu.matmul %13, %12, %cst_15 {dimension_numbers = #tpu.dot_dimension_numbers<[1], [0], [0], [1], [0, 0, 1, 1], [], []>} : vector<32x8xf32>, vector<8x16xf32>, vector<32x16xf32> -> vector<32x16xf32>
    %15 = arith.addf %11, %14 : vector<32x16xf32>
    %c0_16 = arith.constant 0 : index
    %c8 = arith.constant 8 : index
    %16 = vector.load %arg2[%c0_16, %c8] : memref<240x128xf32, #tpu.memory_space<vmem>>, vector<32x1xf32>
    %17 = vector.broadcast %16 : vector<32x1xf32> to vector<32x16xf32>
    %18 = arith.addf %15, %17 : vector<32x16xf32>
    %19 = vector.extract_strided_slice %18 {offsets = [0, 0], sizes = [16, 16], strides = [1, 1]} : vector<32x16xf32> to vector<16x16xf32>
    %cst_17 = arith.constant 0.000000e+00 : f32
    %20 = vector.broadcast %cst_17 : f32 to vector<16x16xf32>
    %21 = arith.maximumf %19, %20 : vector<16x16xf32>
    %22 = vector.extract_strided_slice %18 {offsets = [16, 0], sizes = [16, 16], strides = [1, 1]} : vector<32x16xf32> to vector<16x16xf32>
    %c0_18 = arith.constant 0 : index
    %c4_19 = arith.constant 4 : index
    %23 = vector.load %arg4[%c0_18, %c4_19] : memref<32x20xf32, #tpu.memory_space<vmem>>, vector<16x16xf32>
    tpu.vector_store %arg4[%c0_18, %c4_19], %21 {strides = array<i32>} : memref<32x20xf32, #tpu.memory_space<vmem>>, vector<16x16xf32>,
    %c0_20 = arith.constant 0 : index
    %c2_21 = arith.constant 2 : index
    %24 = vector.load %arg4[%c0_20, %c2_21] : memref<32x20xf32, #tpu.memory_space<vmem>>, vector<16x16xf32>
    %c96 = arith.constant 96 : index
    %c0_22 = arith.constant 0 : index
    %25 = vector.load %arg2[%c96, %c0_22] : memref<240x128xf32, #tpu.memory_space<vmem>>, vector<16x16xf32>
    %cst_23 = arith.constant dense<0.000000e+00> : vector<16x16xf32>
    %26 = tpu.matmul %25, %24, %cst_23 {dimension_numbers = #tpu.dot_dimension_numbers<[1], [0], [0], [1], [0, 0, 1, 1], [], []>} : vector<16x16xf32>, vector<16x16xf32>, vector<16x16xf32> -> vector<16x16xf32>
    %c0_24 = arith.constant 0 : index
    %c3_25 = arith.constant 3 : index
    %27 = vector.load %arg4[%c0_24, %c3_25] : memref<32x20xf32, #tpu.memory_space<vmem>>, vector<16x16xf32>
    %c112 = arith.constant 112 : index
    %c0_26 = arith.constant 0 : index
    %28 = vector.load %arg2[%c112, %c0_26] : memref<240x128xf32, #tpu.memory_space<vmem>>, vector<16x16xf32>
    %cst_27 = arith.constant dense<0.000000e+00> : vector<16x16xf32>
    %29 = tpu.matmul %28, %27, %cst_27 {dimension_numbers = #tpu.dot_dimension_numbers<[1], [0], [0], [1], [0, 0, 1, 1], [], []>} : vector<16x16xf32>, vector<16x16xf32>, vector<16x16xf32> -> vector<16x16xf32>
    %30 = arith.addf %26, %29 : vector<16x16xf32>
    %c0_28 = arith.constant 0 : index
    %c4_29 = arith.constant 4 : index
    %31 = vector.load %arg4[%c0_28, %c4_29] : memref<32x20xf32, #tpu.memory_space<vmem>>, vector<16x16xf32>
    %c128 = arith.constant 128 : index
    %c0_30 = arith.constant 0 : index
    %32 = vector.load %arg2[%c128, %c0_30] : memref<240x128xf32, #tpu.memory_space<vmem>>, vector<16x16xf32>
    %cst_31 = arith.constant dense<0.000000e+00> : vector<16x16xf32>
    %33 = tpu.matmul %32, %31, %cst_31 {dimension_numbers = #tpu.dot_dimension_numbers<[1], [0], [0], [1], [0, 0, 1, 1], [], []>} : vector<16x16xf32>, vector<16x16xf32>, vector<16x16xf32> -> vector<16x16xf32>
    %34 = arith.addf %30, %33 : vector<16x16xf32>
    %c96_32 = arith.constant 96 : index
    %c16 = arith.constant 16 : index
    %35 = vector.load %arg2[%c96_32, %c16] : memref<240x128xf32, #tpu.memory_space<vmem>>, vector<16x1xf32>
    %36 = vector.broadcast %35 : vector<16x1xf32> to vector<16x16xf32>
    %37 = arith.addf %34, %36 : vector<16x16xf32>
    %cst_33 = arith.constant 0.000000e+00 : f32
    %38 = vector.broadcast %cst_33 : f32 to vector<16x16xf32>
    %39 = arith.maximumf %37, %38 : vector<16x16xf32>
    %40 = arith.addf %39, %22 : vector<16x16xf32>
    %cst_34 = arith.constant 0.000000e+00 : f32
    %41 = vector.broadcast %cst_34 : f32 to vector<16x16xf32>
    %42 = arith.maximumf %40, %41 : vector<16x16xf32>
    %c0_35 = arith.constant 0 : index
    %c4_36 = arith.constant 4 : index
    %43 = vector.load %arg4[%c0_35, %c4_36] : memref<32x20xf32, #tpu.memory_space<vmem>>, vector<16x16xf32>
    tpu.vector_store %arg4[%c0_35, %c4_36], %42 {strides = array<i32>} : memref<32x20xf32, #tpu.memory_space<vmem>>, vector<16x16xf32>,
    %c0_37 = arith.constant 0 : index
    %c0_38 = arith.constant 0 : index
    %44 = vector.load %arg4[%c0_37, %c0_38] : memref<32x20xf32, #tpu.memory_space<vmem>>, vector<16x16xf32>
    %c144 = arith.constant 144 : index
    %c0_39 = arith.constant 0 : index
    %45 = vector.load %arg2[%c144, %c0_39] : memref<240x128xf32, #tpu.memory_space<vmem>>, vector<16x16xf32>
    %cst_40 = arith.constant dense<0.000000e+00> : vector<16x16xf32>
    %46 = tpu.matmul %45, %44, %cst_40 {dimension_numbers = #tpu.dot_dimension_numbers<[1], [0], [0], [1], [0, 0, 1, 1], [], []>} : vector<16x16xf32>, vector<16x16xf32>, vector<16x16xf32> -> vector<16x16xf32>
    %c0_41 = arith.constant 0 : index
    %c2_42 = arith.constant 2 : index
    %47 = vector.load %arg4[%c0_41, %c2_42] : memref<32x20xf32, #tpu.memory_space<vmem>>, vector<16x16xf32>
    %c160 = arith.constant 160 : index
    %c0_43 = arith.constant 0 : index
    %48 = vector.load %arg2[%c160, %c0_43] : memref<240x128xf32, #tpu.memory_space<vmem>>, vector<16x16xf32>
    %cst_44 = arith.constant dense<0.000000e+00> : vector<16x16xf32>
    %49 = tpu.matmul %48, %47, %cst_44 {dimension_numbers = #tpu.dot_dimension_numbers<[1], [0], [0], [1], [0, 0, 1, 1], [], []>} : vector<16x16xf32>, vector<16x16xf32>, vector<16x16xf32> -> vector<16x16xf32>
    %50 = arith.addf %46, %49 : vector<16x16xf32>
    %c0_45 = arith.constant 0 : index
    %c4_46 = arith.constant 4 : index
    %51 = vector.load %arg4[%c0_45, %c4_46] : memref<32x20xf32, #tpu.memory_space<vmem>>, vector<16x16xf32>
    %c176 = arith.constant 176 : index
    %c0_47 = arith.constant 0 : index
    %52 = vector.load %arg2[%c176, %c0_47] : memref<240x128xf32, #tpu.memory_space<vmem>>, vector<16x16xf32>
    %cst_48 = arith.constant dense<0.000000e+00> : vector<16x16xf32>
    %53 = tpu.matmul %52, %51, %cst_48 {dimension_numbers = #tpu.dot_dimension_numbers<[1], [0], [0], [1], [0, 0, 1, 1], [], []>} : vector<16x16xf32>, vector<16x16xf32>, vector<16x16xf32> -> vector<16x16xf32>
    %54 = arith.addf %50, %53 : vector<16x16xf32>
    %c144_49 = arith.constant 144 : index
    %c16_50 = arith.constant 16 : index
    %55 = vector.load %arg2[%c144_49, %c16_50] : memref<240x128xf32, #tpu.memory_space<vmem>>, vector<16x1xf32>
    %56 = vector.broadcast %55 : vector<16x1xf32> to vector<16x16xf32>
    %57 = arith.addf %54, %56 : vector<16x16xf32>
    %cst_51 = arith.constant 0.000000e+00 : f32
    %58 = vector.broadcast %cst_51 : f32 to vector<16x16xf32>
    %59 = arith.maximumf %57, %58 : vector<16x16xf32>
    %c0_52 = arith.constant 0 : index
    %c4_53 = arith.constant 4 : index
    %60 = vector.load %arg4[%c0_52, %c4_53] : memref<32x20xf32, #tpu.memory_space<vmem>>, vector<16x16xf32>
    tpu.vector_store %arg4[%c0_52, %c4_53], %59 {strides = array<i32>} : memref<32x20xf32, #tpu.memory_space<vmem>>, vector<16x16xf32>,
    %c0_54 = arith.constant 0 : index
    %c0_55 = arith.constant 0 : index
    %61 = vector.load %arg4[%c0_54, %c0_55] : memref<32x20xf32, #tpu.memory_space<vmem>>, vector<16x16xf32>
    %c192 = arith.constant 192 : index
    %c0_56 = arith.constant 0 : index
    %62 = vector.load %arg2[%c192, %c0_56] : memref<240x128xf32, #tpu.memory_space<vmem>>, vector<16x16xf32>
    %cst_57 = arith.constant dense<0.000000e+00> : vector<16x16xf32>
    %63 = tpu.matmul %62, %61, %cst_57 {dimension_numbers = #tpu.dot_dimension_numbers<[1], [0], [0], [1], [0, 0, 1, 1], [], []>} : vector<16x16xf32>, vector<16x16xf32>, vector<16x16xf32> -> vector<16x16xf32>
    %c0_58 = arith.constant 0 : index
    %c2_59 = arith.constant 2 : index
    %64 = vector.load %arg4[%c0_58, %c2_59] : memref<32x20xf32, #tpu.memory_space<vmem>>, vector<16x16xf32>
    %c208 = arith.constant 208 : index
    %c0_60 = arith.constant 0 : index
    %65 = vector.load %arg2[%c208, %c0_60] : memref<240x128xf32, #tpu.memory_space<vmem>>, vector<16x16xf32>
    %cst_61 = arith.constant dense<0.000000e+00> : vector<16x16xf32>
    %66 = tpu.matmul %65, %64, %cst_61 {dimension_numbers = #tpu.dot_dimension_numbers<[1], [0], [0], [1], [0, 0, 1, 1], [], []>} : vector<16x16xf32>, vector<16x16xf32>, vector<16x16xf32> -> vector<16x16xf32>
    %67 = arith.addf %63, %66 : vector<16x16xf32>
    %c0_62 = arith.constant 0 : index
    %c4_63 = arith.constant 4 : index
    %68 = vector.load %arg4[%c0_62, %c4_63] : memref<32x20xf32, #tpu.memory_space<vmem>>, vector<16x16xf32>
    %c224 = arith.constant 224 : index
    %c0_64 = arith.constant 0 : index
    %69 = vector.load %arg2[%c224, %c0_64] : memref<240x128xf32, #tpu.memory_space<vmem>>, vector<16x16xf32>
    %cst_65 = arith.constant dense<0.000000e+00> : vector<16x16xf32>
    %70 = tpu.matmul %69, %68, %cst_65 {dimension_numbers = #tpu.dot_dimension_numbers<[1], [0], [0], [1], [0, 0, 1, 1], [], []>} : vector<16x16xf32>, vector<16x16xf32>, vector<16x16xf32> -> vector<16x16xf32>
    %71 = arith.addf %67, %70 : vector<16x16xf32>
    %c192_66 = arith.constant 192 : index
    %c16_67 = arith.constant 16 : index
    %72 = vector.load %arg2[%c192_66, %c16_67] : memref<240x128xf32, #tpu.memory_space<vmem>>, vector<16x1xf32>
    %73 = vector.broadcast %72 : vector<16x1xf32> to vector<16x16xf32>
    %74 = arith.addf %71, %73 : vector<16x16xf32>
    %cst_68 = arith.constant 0.000000e+00 : f32
    %75 = vector.broadcast %cst_68 : f32 to vector<16x16xf32>
    %76 = arith.maximumf %74, %75 : vector<16x16xf32>
    %77 = arith.addf %76, %42 : vector<16x16xf32>
    %cst_69 = arith.constant 0.000000e+00 : f32
    %78 = vector.broadcast %cst_69 : f32 to vector<16x16xf32>
    %79 = arith.maximumf %77, %78 : vector<16x16xf32>
    %c0_70 = arith.constant 0 : index
    %c0_71 = arith.constant 0 : index
    %c0_72 = arith.constant 0 : index
    %80 = vector.load %arg3[%c0_70, %c0_71, %c0_72] : memref<2x16x16xf32, #tpu.memory_space<vmem>>, vector<1x16x16xf32>
    %81 = vector.shape_cast %80 : vector<1x16x16xf32> to vector<16x16xf32>
    %82 = vector.shape_cast %79 : vector<16x16xf32> to vector<1x16x16xf32>
    tpu.vector_store %arg3[%c0_70, %c0_71, %c0_72], %82 {strides = array<i32>} : memref<2x16x16xf32, #tpu.memory_space<vmem>>, vector<1x16x16xf32>,
    %c1 = arith.constant 1 : index
    %c0_73 = arith.constant 0 : index
    %c0_74 = arith.constant 0 : index
    %83 = vector.load %arg1[%c1, %c0_73, %c0_74] : memref<2x8x16xf32, #tpu.memory_space<vmem>>, vector<1x8x16xf32>
    %84 = vector.shape_cast %83 : vector<1x8x16xf32> to vector<8x16xf32>
    %c16_75 = arith.constant 16 : index
    %c4_76 = arith.constant 4 : index
    %85 = vector.load %arg4[%c16_75, %c4_76] : memref<32x20xf32, #tpu.memory_space<vmem>>, vector<8x16xf32>
    tpu.vector_store %arg4[%c16_75, %c4_76], %84 {strides = array<i32>} : memref<32x20xf32, #tpu.memory_space<vmem>>, vector<8x16xf32>,
    %c16_77 = arith.constant 16 : index
    %c2_78 = arith.constant 2 : index
    %86 = vector.load %arg4[%c16_77, %c2_78] : memref<32x20xf32, #tpu.memory_space<vmem>>, vector<8x16xf32>
    %c0_79 = arith.constant 0 : index
    %c0_80 = arith.constant 0 : index
    %87 = vector.load %arg2[%c0_79, %c0_80] : memref<240x128xf32, #tpu.memory_space<vmem>>, vector<32x8xf32>
    %cst_81 = arith.constant dense<0.000000e+00> : vector<32x16xf32>
    %88 = tpu.matmul %87, %86, %cst_81 {dimension_numbers = #tpu.dot_dimension_numbers<[1], [0], [0], [1], [0, 0, 1, 1], [], []>} : vector<32x8xf32>, vector<8x16xf32>, vector<32x16xf32> -> vector<32x16xf32>
    %c16_82 = arith.constant 16 : index
    %c3_83 = arith.constant 3 : index
    %89 = vector.load %arg4[%c16_82, %c3_83] : memref<32x20xf32, #tpu.memory_space<vmem>>, vector<8x16xf32>
    %c32_84 = arith.constant 32 : index
    %c0_85 = arith.constant 0 : index
    %90 = vector.load %arg2[%c32_84, %c0_85] : memref<240x128xf32, #tpu.memory_space<vmem>>, vector<32x8xf32>
    %cst_86 = arith.constant dense<0.000000e+00> : vector<32x16xf32>
    %91 = tpu.matmul %90, %89, %cst_86 {dimension_numbers = #tpu.dot_dimension_numbers<[1], [0], [0], [1], [0, 0, 1, 1], [], []>} : vector<32x8xf32>, vector<8x16xf32>, vector<32x16xf32> -> vector<32x16xf32>
    %92 = arith.addf %88, %91 : vector<32x16xf32>
    %c16_87 = arith.constant 16 : index
    %c4_88 = arith.constant 4 : index
    %93 = vector.load %arg4[%c16_87, %c4_88] : memref<32x20xf32, #tpu.memory_space<vmem>>, vector<8x16xf32>
    %c64_89 = arith.constant 64 : index
    %c0_90 = arith.constant 0 : index
    %94 = vector.load %arg2[%c64_89, %c0_90] : memref<240x128xf32, #tpu.memory_space<vmem>>, vector<32x8xf32>
    %cst_91 = arith.constant dense<0.000000e+00> : vector<32x16xf32>
    %95 = tpu.matmul %94, %93, %cst_91 {dimension_numbers = #tpu.dot_dimension_numbers<[1], [0], [0], [1], [0, 0, 1, 1], [], []>} : vector<32x8xf32>, vector<8x16xf32>, vector<32x16xf32> -> vector<32x16xf32>
    %96 = arith.addf %92, %95 : vector<32x16xf32>
    %c0_92 = arith.constant 0 : index
    %c8_93 = arith.constant 8 : index
    %97 = vector.load %arg2[%c0_92, %c8_93] : memref<240x128xf32, #tpu.memory_space<vmem>>, vector<32x1xf32>
    %98 = vector.broadcast %97 : vector<32x1xf32> to vector<32x16xf32>
    %99 = arith.addf %96, %98 : vector<32x16xf32>
    %100 = vector.extract_strided_slice %99 {offsets = [0, 0], sizes = [16, 16], strides = [1, 1]} : vector<32x16xf32> to vector<16x16xf32>
    %cst_94 = arith.constant 0.000000e+00 : f32
    %101 = vector.broadcast %cst_94 : f32 to vector<16x16xf32>
    %102 = arith.maximumf %100, %101 : vector<16x16xf32>
    %103 = vector.extract_strided_slice %99 {offsets = [16, 0], sizes = [16, 16], strides = [1, 1]} : vector<32x16xf32> to vector<16x16xf32>
    %c16_95 = arith.constant 16 : index
    %c4_96 = arith.constant 4 : index
    %104 = vector.load %arg4[%c16_95, %c4_96] : memref<32x20xf32, #tpu.memory_space<vmem>>, vector<16x16xf32>
    tpu.vector_store %arg4[%c16_95, %c4_96], %102 {strides = array<i32>} : memref<32x20xf32, #tpu.memory_space<vmem>>, vector<16x16xf32>,
    %c16_97 = arith.constant 16 : index
    %c2_98 = arith.constant 2 : index
    %105 = vector.load %arg4[%c16_97, %c2_98] : memref<32x20xf32, #tpu.memory_space<vmem>>, vector<16x16xf32>
    %c96_99 = arith.constant 96 : index
    %c0_100 = arith.constant 0 : index
    %106 = vector.load %arg2[%c96_99, %c0_100] : memref<240x128xf32, #tpu.memory_space<vmem>>, vector<16x16xf32>
    %cst_101 = arith.constant dense<0.000000e+00> : vector<16x16xf32>
    %107 = tpu.matmul %106, %105, %cst_101 {dimension_numbers = #tpu.dot_dimension_numbers<[1], [0], [0], [1], [0, 0, 1, 1], [], []>} : vector<16x16xf32>, vector<16x16xf32>, vector<16x16xf32> -> vector<16x16xf32>
    %c16_102 = arith.constant 16 : index
    %c3_103 = arith.constant 3 : index
    %108 = vector.load %arg4[%c16_102, %c3_103] : memref<32x20xf32, #tpu.memory_space<vmem>>, vector<16x16xf32>
    %c112_104 = arith.constant 112 : index
    %c0_105 = arith.constant 0 : index
    %109 = vector.load %arg2[%c112_104, %c0_105] : memref<240x128xf32, #tpu.memory_space<vmem>>, vector<16x16xf32>
    %cst_106 = arith.constant dense<0.000000e+00> : vector<16x16xf32>
    %110 = tpu.matmul %109, %108, %cst_106 {dimension_numbers = #tpu.dot_dimension_numbers<[1], [0], [0], [1], [0, 0, 1, 1], [], []>} : vector<16x16xf32>, vector<16x16xf32>, vector<16x16xf32> -> vector<16x16xf32>
    %111 = arith.addf %107, %110 : vector<16x16xf32>
    %c16_107 = arith.constant 16 : index
    %c4_108 = arith.constant 4 : index
    %112 = vector.load %arg4[%c16_107, %c4_108] : memref<32x20xf32, #tpu.memory_space<vmem>>, vector<16x16xf32>
    %c128_109 = arith.constant 128 : index
    %c0_110 = arith.constant 0 : index
    %113 = vector.load %arg2[%c128_109, %c0_110] : memref<240x128xf32, #tpu.memory_space<vmem>>, vector<16x16xf32>
    %cst_111 = arith.constant dense<0.000000e+00> : vector<16x16xf32>
    %114 = tpu.matmul %113, %112, %cst_111 {dimension_numbers = #tpu.dot_dimension_numbers<[1], [0], [0], [1], [0, 0, 1, 1], [], []>} : vector<16x16xf32>, vector<16x16xf32>, vector<16x16xf32> -> vector<16x16xf32>
    %115 = arith.addf %111, %114 : vector<16x16xf32>
    %c96_112 = arith.constant 96 : index
    %c16_113 = arith.constant 16 : index
    %116 = vector.load %arg2[%c96_112, %c16_113] : memref<240x128xf32, #tpu.memory_space<vmem>>, vector<16x1xf32>
    %117 = vector.broadcast %116 : vector<16x1xf32> to vector<16x16xf32>
    %118 = arith.addf %115, %117 : vector<16x16xf32>
    %cst_114 = arith.constant 0.000000e+00 : f32
    %119 = vector.broadcast %cst_114 : f32 to vector<16x16xf32>
    %120 = arith.maximumf %118, %119 : vector<16x16xf32>
    %121 = arith.addf %120, %103 : vector<16x16xf32>
    %cst_115 = arith.constant 0.000000e+00 : f32
    %122 = vector.broadcast %cst_115 : f32 to vector<16x16xf32>
    %123 = arith.maximumf %121, %122 : vector<16x16xf32>
    %c16_116 = arith.constant 16 : index
    %c4_117 = arith.constant 4 : index
    %124 = vector.load %arg4[%c16_116, %c4_117] : memref<32x20xf32, #tpu.memory_space<vmem>>, vector<16x16xf32>
    tpu.vector_store %arg4[%c16_116, %c4_117], %123 {strides = array<i32>} : memref<32x20xf32, #tpu.memory_space<vmem>>, vector<16x16xf32>,
    %c16_118 = arith.constant 16 : index
    %c0_119 = arith.constant 0 : index
    %125 = vector.load %arg4[%c16_118, %c0_119] : memref<32x20xf32, #tpu.memory_space<vmem>>, vector<16x16xf32>
    %c144_120 = arith.constant 144 : index
    %c0_121 = arith.constant 0 : index
    %126 = vector.load %arg2[%c144_120, %c0_121] : memref<240x128xf32, #tpu.memory_space<vmem>>, vector<16x16xf32>
    %cst_122 = arith.constant dense<0.000000e+00> : vector<16x16xf32>
    %127 = tpu.matmul %126, %125, %cst_122 {dimension_numbers = #tpu.dot_dimension_numbers<[1], [0], [0], [1], [0, 0, 1, 1], [], []>} : vector<16x16xf32>, vector<16x16xf32>, vector<16x16xf32> -> vector<16x16xf32>
    %c16_123 = arith.constant 16 : index
    %c2_124 = arith.constant 2 : index
    %128 = vector.load %arg4[%c16_123, %c2_124] : memref<32x20xf32, #tpu.memory_space<vmem>>, vector<16x16xf32>
    %c160_125 = arith.constant 160 : index
    %c0_126 = arith.constant 0 : index
    %129 = vector.load %arg2[%c160_125, %c0_126] : memref<240x128xf32, #tpu.memory_space<vmem>>, vector<16x16xf32>
    %cst_127 = arith.constant dense<0.000000e+00> : vector<16x16xf32>
    %130 = tpu.matmul %129, %128, %cst_127 {dimension_numbers = #tpu.dot_dimension_numbers<[1], [0], [0], [1], [0, 0, 1, 1], [], []>} : vector<16x16xf32>, vector<16x16xf32>, vector<16x16xf32> -> vector<16x16xf32>
    %131 = arith.addf %127, %130 : vector<16x16xf32>
    %c16_128 = arith.constant 16 : index
    %c4_129 = arith.constant 4 : index
    %132 = vector.load %arg4[%c16_128, %c4_129] : memref<32x20xf32, #tpu.memory_space<vmem>>, vector<16x16xf32>
    %c176_130 = arith.constant 176 : index
    %c0_131 = arith.constant 0 : index
    %133 = vector.load %arg2[%c176_130, %c0_131] : memref<240x128xf32, #tpu.memory_space<vmem>>, vector<16x16xf32>
    %cst_132 = arith.constant dense<0.000000e+00> : vector<16x16xf32>
    %134 = tpu.matmul %133, %132, %cst_132 {dimension_numbers = #tpu.dot_dimension_numbers<[1], [0], [0], [1], [0, 0, 1, 1], [], []>} : vector<16x16xf32>, vector<16x16xf32>, vector<16x16xf32> -> vector<16x16xf32>
    %135 = arith.addf %131, %134 : vector<16x16xf32>
    %c144_133 = arith.constant 144 : index
    %c16_134 = arith.constant 16 : index
    %136 = vector.load %arg2[%c144_133, %c16_134] : memref<240x128xf32, #tpu.memory_space<vmem>>, vector<16x1xf32>
    %137 = vector.broadcast %136 : vector<16x1xf32> to vector<16x16xf32>
    %138 = arith.addf %135, %137 : vector<16x16xf32>
    %cst_135 = arith.constant 0.000000e+00 : f32
    %139 = vector.broadcast %cst_135 : f32 to vector<16x16xf32>
    %140 = arith.maximumf %138, %139 : vector<16x16xf32>
    %c16_136 = arith.constant 16 : index
    %c4_137 = arith.constant 4 : index
    %141 = vector.load %arg4[%c16_136, %c4_137] : memref<32x20xf32, #tpu.memory_space<vmem>>, vector<16x16xf32>
    tpu.vector_store %arg4[%c16_136, %c4_137], %140 {strides = array<i32>} : memref<32x20xf32, #tpu.memory_space<vmem>>, vector<16x16xf32>,
    %c16_138 = arith.constant 16 : index
    %c0_139 = arith.constant 0 : index
    %142 = vector.load %arg4[%c16_138, %c0_139] : memref<32x20xf32, #tpu.memory_space<vmem>>, vector<16x16xf32>
    %c192_140 = arith.constant 192 : index
    %c0_141 = arith.constant 0 : index
    %143 = vector.load %arg2[%c192_140, %c0_141] : memref<240x128xf32, #tpu.memory_space<vmem>>, vector<16x16xf32>
    %cst_142 = arith.constant dense<0.000000e+00> : vector<16x16xf32>
    %144 = tpu.matmul %143, %142, %cst_142 {dimension_numbers = #tpu.dot_dimension_numbers<[1], [0], [0], [1], [0, 0, 1, 1], [], []>} : vector<16x16xf32>, vector<16x16xf32>, vector<16x16xf32> -> vector<16x16xf32>
    %c16_143 = arith.constant 16 : index
    %c2_144 = arith.constant 2 : index
    %145 = vector.load %arg4[%c16_143, %c2_144] : memref<32x20xf32, #tpu.memory_space<vmem>>, vector<16x16xf32>
    %c208_145 = arith.constant 208 : index
    %c0_146 = arith.constant 0 : index
    %146 = vector.load %arg2[%c208_145, %c0_146] : memref<240x128xf32, #tpu.memory_space<vmem>>, vector<16x16xf32>
    %cst_147 = arith.constant dense<0.000000e+00> : vector<16x16xf32>
    %147 = tpu.matmul %146, %145, %cst_147 {dimension_numbers = #tpu.dot_dimension_numbers<[1], [0], [0], [1], [0, 0, 1, 1], [], []>} : vector<16x16xf32>, vector<16x16xf32>, vector<16x16xf32> -> vector<16x16xf32>
    %148 = arith.addf %144, %147 : vector<16x16xf32>
    %c16_148 = arith.constant 16 : index
    %c4_149 = arith.constant 4 : index
    %149 = vector.load %arg4[%c16_148, %c4_149] : memref<32x20xf32, #tpu.memory_space<vmem>>, vector<16x16xf32>
    %c224_150 = arith.constant 224 : index
    %c0_151 = arith.constant 0 : index
    %150 = vector.load %arg2[%c224_150, %c0_151] : memref<240x128xf32, #tpu.memory_space<vmem>>, vector<16x16xf32>
    %cst_152 = arith.constant dense<0.000000e+00> : vector<16x16xf32>
    %151 = tpu.matmul %150, %149, %cst_152 {dimension_numbers = #tpu.dot_dimension_numbers<[1], [0], [0], [1], [0, 0, 1, 1], [], []>} : vector<16x16xf32>, vector<16x16xf32>, vector<16x16xf32> -> vector<16x16xf32>
    %152 = arith.addf %148, %151 : vector<16x16xf32>
    %c192_153 = arith.constant 192 : index
    %c16_154 = arith.constant 16 : index
    %153 = vector.load %arg2[%c192_153, %c16_154] : memref<240x128xf32, #tpu.memory_space<vmem>>, vector<16x1xf32>
    %154 = vector.broadcast %153 : vector<16x1xf32> to vector<16x16xf32>
    %155 = arith.addf %152, %154 : vector<16x16xf32>
    %cst_155 = arith.constant 0.000000e+00 : f32
    %156 = vector.broadcast %cst_155 : f32 to vector<16x16xf32>
    %157 = arith.maximumf %155, %156 : vector<16x16xf32>
    %158 = arith.addf %157, %123 : vector<16x16xf32>
    %cst_156 = arith.constant 0.000000e+00 : f32
    %159 = vector.broadcast %cst_156 : f32 to vector<16x16xf32>
    %160 = arith.maximumf %158, %159 : vector<16x16xf32>
    %c1_157 = arith.constant 1 : index
    %c0_158 = arith.constant 0 : index
    %c0_159 = arith.constant 0 : index
    %161 = vector.load %arg3[%c1_157, %c0_158, %c0_159] : memref<2x16x16xf32, #tpu.memory_space<vmem>>, vector<1x16x16xf32>
    %162 = vector.shape_cast %161 : vector<1x16x16xf32> to vector<16x16xf32>
    %163 = vector.shape_cast %160 : vector<16x16xf32> to vector<1x16x16xf32>
    tpu.vector_store %arg3[%c1_157, %c0_158, %c0_159], %163 {strides = array<i32>} : memref<2x16x16xf32, #tpu.memory_space<vmem>>, vector<1x16x16xf32>,
    return
  }
  func.func @transform_0(%arg0: i32) -> (i32, i32, i32) {
    %c0_i32 = arith.constant 0 : i32
    %c0_i32_0 = arith.constant 0 : i32
    %c0_i32_1 = arith.constant 0 : i32
    return %arg0, %c0_i32, %c0_i32_0 : i32, i32, i32
  }
  func.func @transform_1(%arg0: i32) -> (i32, i32) {
    %c0_i32 = arith.constant 0 : i32
    %c0_i32_0 = arith.constant 0 : i32
    %c0_i32_1 = arith.constant 0 : i32
    return %c0_i32, %c0_i32_0 : i32, i32
  }
  func.func @transform_2(%arg0: i32) -> (i32, i32, i32) {
    %c0_i32 = arith.constant 0 : i32
    %c0_i32_0 = arith.constant 0 : i32
    %c0_i32_1 = arith.constant 0 : i32
    return %arg0, %c0_i32, %c0_i32_0 : i32, i32, i32
  }
}

</mosaic_0001>

<llo_original>
// kernel: tpu_custom_call.1
$region0: #{tpu_custom_call.1}
  #allocation0 [shape = 'u32[]', space=smem, size = 0x4, offset = 0x4, fixed_abs, tag = 'smem constant byte address 0x4 - core index']
  #allocation1 [shape = 'u32[144,128]{1,0:T(1,128)}', space=vmem, size = 0x12000, scoped, tag = 'internal scratch']
  #allocation2 [shape = 'f32[32,20]{1,0:T(8,128)}', space=vmem, size = 0x4000, scoped, tag = 'scratch operand']
  %s0 = inlined_call_operand.hbm [shape: f32[2,8,16], index: 0, kind: input, shape index: {}]
  %s1 = inlined_call_operand.hbm [shape: f32[240,128], index: 1, kind: input, shape index: {}]
  %s2 = inlined_call_operand.hbm [shape: f32[2,16,16], index: 2, kind: output, shape index: {}]
  %s3 = sld [smem:[#allocation0]]
  $region26: #{tpu_custom_call.1} parent=0
    _
  %s5 = ssub.s32 1, %s3
  %s6 = scalar_select 0, %s5, %s3
  $region1: #{tpu_custom_call.1} parent=0
    #allocation3 [shape = 'u8[8192]{0}', space=vmem, size = 0x2000, scoped, tag = 'input window, operand 0, single buffered']
    #allocation4 [shape = 's32[1]{0}', space=sflag, size = 0x4, scoped, tag = 'scoped memory for tpu_custom_call.1']
    #allocation5 [shape = 's32[1]{0}', space=sflag, size = 0x4, scoped, tag = 'scoped memory for tpu_custom_call.1']
    #allocation6 [shape = 'u8[122880]{0}', space=vmem, size = 0x1e000, scoped, tag = 'input window, operand 1, single buffered']
    #allocation7 [shape = 's32[1]{0}', space=sflag, size = 0x4, scoped, tag = 'scoped memory for tpu_custom_call.1']
    #allocation8 [shape = 'u8[16384]{0}', space=vmem, size = 0x4000, scoped, tag = 'output window, operand 0, single buffered']
    %7 = vsyncpa [#allocation4], 0
    %8 = vsyncpa [#allocation7], 0
    %9 = vsyncpa [#allocation5], 0
    // Predicated region
    $region2: #{tpu_custom_call.1} parent=1 // pred_check
      _
    $region3: #{tpu_custom_call.1} parent=1 // pred_check_branch
      %11 = sbr.rel (0) target = $region5
    $region4: #{tpu_custom_call.1} parent=1 // pred_region
      %s13 = ssub.s32 256, 256
      %14 = vsyncadd [#allocation4], %s13
      %s15 = sshll.u32 [#allocation3], 4
      %s16 = int_to_ptr.vmem [resolvable:$true] %s15
      %21 = dma.hbm_to_vmem [thread:$0]  %s0, 256, %s16, [#allocation4], 128, 128, 8
    $region5: #{tpu_custom_call.1} parent=1 // pred_fallthru
      _
    // Predicated region
    $region6: #{tpu_custom_call.1} parent=1 // pred_check
      _
    $region7: #{tpu_custom_call.1} parent=1 // pred_check_branch
      %23 = sbr.rel (0) target = $region9
    $region8: #{tpu_custom_call.1} parent=1 // pred_region
      %s25 = ssub.s32 3840, 3840
      %26 = vsyncadd [#allocation7], %s25
      %s27 = sshll.u32 [#allocation6], 4
      %s28 = int_to_ptr.vmem [resolvable:$true] %s27
      %33 = dma.hbm_to_vmem [thread:$0]  %s1, 3840, %s28, [#allocation7], 128, 128, 8
    $region9: #{tpu_custom_call.1} parent=1 // pred_fallthru
      _
    // Predicated region
    $region10: #{tpu_custom_call.1} parent=1 // pred_check
      _
    $region11: #{tpu_custom_call.1} parent=1 // pred_check_branch
      %35 = sbr.rel (0) target = $region13
    $region12: #{tpu_custom_call.1} parent=1 // pred_region
      %36 = dma.done [#allocation4], 256
    $region13: #{tpu_custom_call.1} parent=1 // pred_fallthru
      _
    // Predicated region
    $region14: #{tpu_custom_call.1} parent=1 // pred_check
      _
    $region15: #{tpu_custom_call.1} parent=1 // pred_check_branch
      %38 = sbr.rel (0) target = $region17
    $region16: #{tpu_custom_call.1} parent=1 // pred_region
      %39 = dma.done [#allocation7], 3840
    $region17: #{tpu_custom_call.1} parent=1 // pred_fallthru
      _
    %vm40 = vcmask 31744
    %41 = vst.msk [vmem:[#allocation2] sm:$0xff] %vm40, 0.0
    %42 = vst.msk [vmem:[#allocation2 + $0x8] sm:$0xff] %vm40, 0.0
    %43 = vst.msk [vmem:[#allocation2 + $0x10] sm:$0xff] %vm40, 0.0
    %44 = vst.msk [vmem:[#allocation2 + $0x18] sm:$0xff] %vm40, 0.0
    %v45 = vld [vmem:[#allocation3] sm:$0xff]
    %47 = vrot.lane.b32.xlu0 %v45, 4
    %v48 = vpop.permute.xlu0 %47
    %vm50 = vcmask 162848
    %51 = vst.msk [vmem:[#allocation2] sm:$0xff] %vm50, %v48
    %v52 = vld [vmem:[#allocation2] sm:$0xff]
    %v53 = vld [vmem:[#allocation6] sm:$0xff]
    %v54 = vld [vmem:[#allocation6 + $0x8] sm:$0xff]
    %v55 = vld [vmem:[#allocation6 + $0x10] sm:$0xff]
    %v56 = vld [vmem:[#allocation6 + $0x18] sm:$0xff]
    %v57 = vld [vmem:[#allocation6 + $0x20] sm:$0xff]
    %v58 = vld [vmem:[#allocation6 + $0x28] sm:$0xff]
    %v59 = vld [vmem:[#allocation6 + $0x30] sm:$0xff]
    %v60 = vld [vmem:[#allocation6 + $0x38] sm:$0xff]
    %62 = vrot.lane.b32.xlu0 %v52, 125
    %v63 = vpop.permute.xlu0 %62
    %vm65 = vcmask 64512
    %v67 = vsel %vm65, %v57, 0
    %v70 = vsel %vm65, %v58, 0
    %v73 = vsel %vm65, %v59, 0
    %v76 = vsel %vm65, %v60, 0
    %78 = vmatprep.subr.mxu0 0.0
    %79 = vmatpush1.msra.mxu0 %v63
    %80 = vmatprep.subr.mxu0 0.0
    %81 = vmatpush1.msra.mxu0 0.0
    %82 = vmatprep.subr.mxu0 0.0
    %83 = vmatpush1.msra.mxu0 0.0
    %84 = vmatprep.subr.mxu0 0.0
    %85 = vmatpush1.msra.mxu0 0.0
    %86 = vmatprep.subr.mxu0 0.0
    %87 = vmatpush1.msra.mxu0 0.0
    %88 = vmatprep.subr.mxu0 0.0
    %89 = vmatpush1.msra.mxu0 0.0
    %90 = vmatprep.subr.mxu0 0.0
    %91 = vmatpush1.msra.mxu0 0.0
    %92 = vmatprep.subr.mxu0 0.0
    %93 = vmatpush1.msra.mxu0 0.0
    %94 = vmatprep.subr.mxu0 0.0
    %95 = vmatpush1.msra.mxu0 0.0
    %96 = vmatprep.subr.mxu0 0.0
    %97 = vmatpush1.msra.mxu0 0.0
    %98 = vmatprep.subr.mxu0 0.0
    %99 = vmatpush1.msra.mxu0 0.0
    %100 = vmatprep.subr.mxu0 0.0
    %101 = vmatpush1.msra.mxu0 0.0
    %102 = vmatprep.subr.mxu0 0.0
    %103 = vmatpush1.msra.mxu0 0.0
    %104 = vmatprep.subr.mxu0 0.0
    %105 = vmatpush1.msra.mxu0 0.0
    %106 = vmatprep.subr.mxu0 0.0
    %107 = vmatpush1.msra.mxu0 0.0
    %108 = vmatprep.subr.mxu0 0.0
    %109 = vmatpush1.msra.mxu0 0.0
    %110 = vmatprep.subr.mxu0 0.0
    %111 = vmatpush1.msra.mxu0 0.0
    %112 = vmatprep.subr.mxu0 0.0
    %113 = vmatpush1.msra.mxu0 0.0
    %114 = vmatprep.subr.mxu0 0.0
    %115 = vmatpush1.msra.mxu0 0.0
    %116 = vmatprep.subr.mxu0 0.0
    %117 = vmatpush1.msra.mxu0 0.0
    %118 = vmatprep.subr.mxu0 0.0
    %119 = vmatpush1.msra.mxu0 0.0
    %120 = vmatprep.subr.mxu0 0.0
    %121 = vmatpush1.msra.mxu0 0.0
    %122 = vmatprep.subr.mxu0 0.0
    %123 = vmatpush1.msra.mxu0 0.0
    %124 = vmatprep.subr.mxu0 0.0
    %125 = vmatpush1.msra.mxu0 0.0
    %126 = vmatprep.subr.mxu0 0.0
    %127 = vmatpush1.msra.mxu0 0.0
    %128 = vmatprep.subr.mxu0 0.0
    %129 = vmatpush1.msra.mxu0 0.0
    %130 = vmatprep.subr.mxu0 0.0
    %131 = vmatpush1.msra.mxu0 0.0
    %132 = vmatprep.subr.mxu0 0.0
    %133 = vmatpush1.msra.mxu0 0.0
    %134 = vmatprep.subr.mxu0 0.0
    %135 = vmatpush1.msra.mxu0 0.0
    %136 = vmatprep.subr.mxu0 0.0
    %137 = vmatpush1.msra.mxu0 0.0
    %138 = vmatprep.subr.mxu0 0.0
    %139 = vmatpush1.msra.mxu0 0.0
    %140 = vmatprep.subr.mxu0 0.0
    %141 = vmatpush1.msra.mxu0 0.0
    %142 = vmatprep.mubr.f32.mxu0 0.0
    %143 = vmatmul.mubr.f32.gmra.mrb[0].mxu0 %v67
    %v144 = vpop.f32.mrb[0].mxu0
    %v145 = vadd.f32 0.0, %v144
    %v146 = vpop.f32.mrb[0].mxu0
    %147 = vmatprep.mubr.f32.mxu0 0.0
    %148 = vmatmul.mubr.f32.gmra.mrb[0].mxu0 %v70
    %v149 = vpop.f32.mrb[0].mxu0
    %v150 = vadd.f32 0.0, %v149
    %v151 = vpop.f32.mrb[0].mxu0
    %152 = vmatprep.mubr.f32.mxu0 0.0
    %153 = vmatmul.mubr.f32.gmra.mrb[0].mxu0 %v73
    %v154 = vpop.f32.mrb[0].mxu0
    %v155 = vadd.f32 0.0, %v154
    %v156 = vpop.f32.mrb[0].mxu0
    %157 = vmatprep.mubr.f32.mxu0 0.0
    %158 = vmatmul.mubr.f32.gmra.mrb[0].mxu0 %v76
    %v159 = vpop.f32.mrb[0].mxu0
    %v160 = vadd.f32 0.0, %v159
    %v161 = vpop.f32.mrb[0].mxu0
    %162 = vdwg.mxu0
    %163 = vrot.lane.b32.xlu0 %v52, 126
    %v164 = vpop.permute.xlu0 %163
    %v167 = vsel %vm65, %v53, 0
    %v170 = vsel %vm65, %v54, 0
    %v173 = vsel %vm65, %v55, 0
    %v176 = vsel %vm65, %v56, 0
    %178 = vmatprep.subr.mxu0 0.0
    %179 = vmatpush1.msra.mxu0 %v164
    %180 = vmatprep.subr.mxu0 0.0
    %181 = vmatpush1.msra.mxu0 0.0
    %182 = vmatprep.subr.mxu0 0.0
    %183 = vmatpush1.msra.mxu0 0.0
    %184 = vmatprep.subr.mxu0 0.0
    %185 = vmatpush1.msra.mxu0 0.0
    %186 = vmatprep.subr.mxu0 0.0
    %187 = vmatpush1.msra.mxu0 0.0
    %188 = vmatprep.subr.mxu0 0.0
    %189 = vmatpush1.msra.mxu0 0.0
    %190 = vmatprep.subr.mxu0 0.0
    %191 = vmatpush1.msra.mxu0 0.0
    %192 = vmatprep.subr.mxu0 0.0
    %193 = vmatpush1.msra.mxu0 0.0
    %194 = vmatprep.subr.mxu0 0.0
    %195 = vmatpush1.msra.mxu0 0.0
    %196 = vmatprep.subr.mxu0 0.0
    %197 = vmatpush1.msra.mxu0 0.0
    %198 = vmatprep.subr.mxu0 0.0
    %199 = vmatpush1.msra.mxu0 0.0
    %200 = vmatprep.subr.mxu0 0.0
    %201 = vmatpush1.msra.mxu0 0.0
    %202 = vmatprep.subr.mxu0 0.0
    %203 = vmatpush1.msra.mxu0 0.0
    %204 = vmatprep.subr.mxu0 0.0
    %205 = vmatpush1.msra.mxu0 0.0
    %206 = vmatprep.subr.mxu0 0.0
    %207 = vmatpush1.msra.mxu0 0.0
    %208 = vmatprep.subr.mxu0 0.0
    %209 = vmatpush1.msra.mxu0 0.0
    %210 = vmatprep.subr.mxu0 0.0
    %211 = vmatpush1.msra.mxu0 0.0
    %212 = vmatprep.subr.mxu0 0.0
    %213 = vmatpush1.msra.mxu0 0.0
    %214 = vmatprep.subr.mxu0 0.0
    %215 = vmatpush1.msra.mxu0 0.0
    %216 = vmatprep.subr.mxu0 0.0
    %217 = vmatpush1.msra.mxu0 0.0
    %218 = vmatprep.subr.mxu0 0.0
    %219 = vmatpush1.msra.mxu0 0.0
    %220 = vmatprep.subr.mxu0 0.0
    %221 = vmatpush1.msra.mxu0 0.0
    %222 = vmatprep.subr.mxu0 0.0
    %223 = vmatpush1.msra.mxu0 0.0
    %224 = vmatprep.subr.mxu0 0.0
    %225 = vmatpush1.msra.mxu0 0.0
    %226 = vmatprep.subr.mxu0 0.0
    %227 = vmatpush1.msra.mxu0 0.0
    %228 = vmatprep.subr.mxu0 0.0
    %229 = vmatpush1.msra.mxu0 0.0
    %230 = vmatprep.subr.mxu0 0.0
    %231 = vmatpush1.msra.mxu0 0.0
    %232 = vmatprep.subr.mxu0 0.0
    %233 = vmatpush1.msra.mxu0 0.0
    %234 = vmatprep.subr.mxu0 0.0
    %235 = vmatpush1.msra.mxu0 0.0
    %236 = vmatprep.subr.mxu0 0.0
    %237 = vmatpush1.msra.mxu0 0.0
    %238 = vmatprep.subr.mxu0 0.0
    %239 = vmatpush1.msra.mxu0 0.0
    %240 = vmatprep.subr.mxu0 0.0
    %241 = vmatpush1.msra.mxu0 0.0
    %242 = vmatprep.mubr.f32.mxu0 0.0
    %243 = vmatmul.mubr.f32.gmra.mrb[0].mxu0 %v167
    %v244 = vpop.f32.mrb[0].mxu0
    %v245 = vadd.f32 %v145, %v244
    %v246 = vpop.f32.mrb[0].mxu0
    %247 = vmatprep.mubr.f32.mxu0 0.0
    %248 = vmatmul.mubr.f32.gmra.mrb[0].mxu0 %v170
    %v249 = vpop.f32.mrb[0].mxu0
    %v250 = vadd.f32 %v150, %v249
    %v251 = vpop.f32.mrb[0].mxu0
    %252 = vmatprep.mubr.f32.mxu0 0.0
    %253 = vmatmul.mubr.f32.gmra.mrb[0].mxu0 %v173
    %v254 = vpop.f32.mrb[0].mxu0
    %v255 = vadd.f32 %v155, %v254
    %v256 = vpop.f32.mrb[0].mxu0
    %257 = vmatprep.mubr.f32.mxu0 0.0
    %258 = vmatmul.mubr.f32.gmra.mrb[0].mxu0 %v176
    %v259 = vpop.f32.mrb[0].mxu0
    %v260 = vadd.f32 %v160, %v259
    %v261 = vpop.f32.mrb[0].mxu0
    %262 = vdwg.mxu0
    %v263 = vld [vmem:[#allocation6 + $0x40] sm:$0xff]
    %v264 = vld [vmem:[#allocation6 + $0x48] sm:$0xff]
    %v265 = vld [vmem:[#allocation6 + $0x50] sm:$0xff]
    %v266 = vld [vmem:[#allocation6 + $0x58] sm:$0xff]
    %267 = vrot.lane.b32.xlu0 %v52, 124
    %v268 = vpop.permute.xlu0 %267
    %v271 = vsel %vm65, %v263, 0
    %v274 = vsel %vm65, %v264, 0
    %v277 = vsel %vm65, %v265, 0
    %v280 = vsel %vm65, %v266, 0
    %282 = vmatprep.subr.mxu0 0.0
    %283 = vmatpush1.msra.mxu0 %v268
    %284 = vmatprep.subr.mxu0 0.0
    %285 = vmatpush1.msra.mxu0 0.0
    %286 = vmatprep.subr.mxu0 0.0
    %287 = vmatpush1.msra.mxu0 0.0
    %288 = vmatprep.subr.mxu0 0.0
    %289 = vmatpush1.msra.mxu0 0.0
    %290 = vmatprep.subr.mxu0 0.0
    %291 = vmatpush1.msra.mxu0 0.0
    %292 = vmatprep.subr.mxu0 0.0
    %293 = vmatpush1.msra.mxu0 0.0
    %294 = vmatprep.subr.mxu0 0.0
    %295 = vmatpush1.msra.mxu0 0.0
    %296 = vmatprep.subr.mxu0 0.0
    %297 = vmatpush1.msra.mxu0 0.0
    %298 = vmatprep.subr.mxu0 0.0
    %299 = vmatpush1.msra.mxu0 0.0
    %300 = vmatprep.subr.mxu0 0.0
    %301 = vmatpush1.msra.mxu0 0.0
    %302 = vmatprep.subr.mxu0 0.0
    %303 = vmatpush1.msra.mxu0 0.0
    %304 = vmatprep.subr.mxu0 0.0
    %305 = vmatpush1.msra.mxu0 0.0
    %306 = vmatprep.subr.mxu0 0.0
    %307 = vmatpush1.msra.mxu0 0.0
    %308 = vmatprep.subr.mxu0 0.0
    %309 = vmatpush1.msra.mxu0 0.0
    %310 = vmatprep.subr.mxu0 0.0
    %311 = vmatpush1.msra.mxu0 0.0
    %312 = vmatprep.subr.mxu0 0.0
    %313 = vmatpush1.msra.mxu0 0.0
    %314 = vmatprep.subr.mxu0 0.0
    %315 = vmatpush1.msra.mxu0 0.0
    %316 = vmatprep.subr.mxu0 0.0
    %317 = vmatpush1.msra.mxu0 0.0
    %318 = vmatprep.subr.mxu0 0.0
    %319 = vmatpush1.msra.mxu0 0.0
    %320 = vmatprep.subr.mxu0 0.0
    %321 = vmatpush1.msra.mxu0 0.0
    %322 = vmatprep.subr.mxu0 0.0
    %323 = vmatpush1.msra.mxu0 0.0
    %324 = vmatprep.subr.mxu0 0.0
    %325 = vmatpush1.msra.mxu0 0.0
    %326 = vmatprep.subr.mxu0 0.0
    %327 = vmatpush1.msra.mxu0 0.0
    %328 = vmatprep.subr.mxu0 0.0
    %329 = vmatpush1.msra.mxu0 0.0
    %330 = vmatprep.subr.mxu0 0.0
    %331 = vmatpush1.msra.mxu0 0.0
    %332 = vmatprep.subr.mxu0 0.0
    %333 = vmatpush1.msra.mxu0 0.0
    %334 = vmatprep.subr.mxu0 0.0
    %335 = vmatpush1.msra.mxu0 0.0
    %336 = vmatprep.subr.mxu0 0.0
    %337 = vmatpush1.msra.mxu0 0.0
    %338 = vmatprep.subr.mxu0 0.0
    %339 = vmatpush1.msra.mxu0 0.0
    %340 = vmatprep.subr.mxu0 0.0
    %341 = vmatpush1.msra.mxu0 0.0
    %342 = vmatprep.subr.mxu0 0.0
    %343 = vmatpush1.msra.mxu0 0.0
    %344 = vmatprep.subr.mxu0 0.0
    %345 = vmatpush1.msra.mxu0 0.0
    %346 = vmatprep.mubr.f32.mxu0 0.0
    %347 = vmatmul.mubr.f32.gmra.mrb[0].mxu0 %v271
    %v348 = vpop.f32.mrb[0].mxu0
    %v349 = vadd.f32 0.0, %v348
    %v350 = vpop.f32.mrb[0].mxu0
    %351 = vmatprep.mubr.f32.mxu0 0.0
    %352 = vmatmul.mubr.f32.gmra.mrb[0].mxu0 %v274
    %v353 = vpop.f32.mrb[0].mxu0
    %v354 = vadd.f32 0.0, %v353
    %v355 = vpop.f32.mrb[0].mxu0
    %356 = vmatprep.mubr.f32.mxu0 0.0
    %357 = vmatmul.mubr.f32.gmra.mrb[0].mxu0 %v277
    %v358 = vpop.f32.mrb[0].mxu0
    %v359 = vadd.f32 0.0, %v358
    %v360 = vpop.f32.mrb[0].mxu0
    %361 = vmatprep.mubr.f32.mxu0 0.0
    %362 = vmatmul.mubr.f32.gmra.mrb[0].mxu0 %v280
    %v363 = vpop.f32.mrb[0].mxu0
    %v364 = vadd.f32 0.0, %v363
    %v365 = vpop.f32.mrb[0].mxu0
    %366 = vdwg.mxu0
    %v367 = vadd.f32 %v245, %v349
    %v368 = vadd.f32 %v250, %v354
    %v369 = vadd.f32 %v255, %v359
    %v370 = vadd.f32 %v260, %v364
    %371 = vset.pattern.permute.xlu0 8
    %372 = vperm.xlu0 %371, %v53
    %v373 = vpop.permute.xlu0 %372
    %375 = vset.pattern.permute.xlu0 8
    %376 = vperm.xlu0 %375, %v54
    %v377 = vpop.permute.xlu0 %376
    %379 = vset.pattern.permute.xlu0 8
    %380 = vperm.xlu0 %379, %v55
    %v381 = vpop.permute.xlu0 %380
    %383 = vset.pattern.permute.xlu0 8
    %384 = vperm.xlu0 %383, %v56
    %v385 = vpop.permute.xlu0 %384
    %v387 = vadd.f32 %v367, %v373
    %v388 = vadd.f32 %v368, %v377
    %v389 = vadd.f32 %v369, %v381
    %v390 = vadd.f32 %v370, %v385
    %v391 = vmax.f32 %v387, 0.0
    %v392 = vmax.f32 %v388, 0.0
    %395 = vrot.lane.b32.xlu0 %v391, 4
    %v396 = vpop.permute.xlu0 %395
    %397 = vrot.lane.b32.xlu0 %v392, 4
    %v398 = vpop.permute.xlu0 %397
    %401 = vst.msk [vmem:[#allocation2] sm:$0xff] %vm50, %v396
    %402 = vst.msk [vmem:[#allocation2 + $0x8] sm:$0xff] %vm50, %v398
    %v403 = vld [vmem:[#allocation2] sm:$0xff]
    %v404 = vld [vmem:[#allocation2 + $0x8] sm:$0xff]
    %v405 = vld [vmem:[#allocation6 + $0x60] sm:$0xff]
    %v406 = vld [vmem:[#allocation6 + $0x68] sm:$0xff]
    %v407 = vld [vmem:[#allocation6 + $0x70] sm:$0xff]
    %v408 = vld [vmem:[#allocation6 + $0x78] sm:$0xff]
    %411 = vrot.lane.b32.xlu0 %v403, 125
    %v412 = vpop.permute.xlu0 %411
    %413 = vrot.lane.b32.xlu0 %v404, 125
    %v414 = vpop.permute.xlu0 %413
    %vm417 = vcmask 130048
    %v419 = vsel %vm417, %v407, 0
    %v422 = vsel %vm417, %v408, 0
    %424 = vmatprep.subr.mxu0 0.0
    %425 = vmatpush1.msra.mxu0 %v412
    %426 = vmatprep.subr.mxu0 0.0
    %427 = vmatpush1.msra.mxu0 %v414
    %428 = vmatprep.subr.mxu0 0.0
    %429 = vmatpush1.msra.mxu0 0.0
    %430 = vmatprep.subr.mxu0 0.0
    %431 = vmatpush1.msra.mxu0 0.0
    %432 = vmatprep.subr.mxu0 0.0
    %433 = vmatpush1.msra.mxu0 0.0
    %434 = vmatprep.subr.mxu0 0.0
    %435 = vmatpush1.msra.mxu0 0.0
    %436 = vmatprep.subr.mxu0 0.0
    %437 = vmatpush1.msra.mxu0 0.0
    %438 = vmatprep.subr.mxu0 0.0
    %439 = vmatpush1.msra.mxu0 0.0
    %440 = vmatprep.subr.mxu0 0.0
    %441 = vmatpush1.msra.mxu0 0.0
    %442 = vmatprep.subr.mxu0 0.0
    %443 = vmatpush1.msra.mxu0 0.0
    %444 = vmatprep.subr.mxu0 0.0
    %445 = vmatpush1.msra.mxu0 0.0
    %446 = vmatprep.subr.mxu0 0.0
    %447 = vmatpush1.msra.mxu0 0.0
    %448 = vmatprep.subr.mxu0 0.0
    %449 = vmatpush1.msra.mxu0 0.0
    %450 = vmatprep.subr.mxu0 0.0
    %451 = vmatpush1.msra.mxu0 0.0
    %452 = vmatprep.subr.mxu0 0.0
    %453 = vmatpush1.msra.mxu0 0.0
    %454 = vmatprep.subr.mxu0 0.0
    %455 = vmatpush1.msra.mxu0 0.0
    %456 = vmatprep.subr.mxu0 0.0
    %457 = vmatpush1.msra.mxu0 0.0
    %458 = vmatprep.subr.mxu0 0.0
    %459 = vmatpush1.msra.mxu0 0.0
    %460 = vmatprep.subr.mxu0 0.0
    %461 = vmatpush1.msra.mxu0 0.0
    %462 = vmatprep.subr.mxu0 0.0
    %463 = vmatpush1.msra.mxu0 0.0
    %464 = vmatprep.subr.mxu0 0.0
    %465 = vmatpush1.msra.mxu0 0.0
    %466 = vmatprep.subr.mxu0 0.0
    %467 = vmatpush1.msra.mxu0 0.0
    %468 = vmatprep.subr.mxu0 0.0
    %469 = vmatpush1.msra.mxu0 0.0
    %470 = vmatprep.subr.mxu0 0.0
    %471 = vmatpush1.msra.mxu0 0.0
    %472 = vmatprep.subr.mxu0 0.0
    %473 = vmatpush1.msra.mxu0 0.0
    %474 = vmatprep.subr.mxu0 0.0
    %475 = vmatpush1.msra.mxu0 0.0
    %476 = vmatprep.subr.mxu0 0.0
    %477 = vmatpush1.msra.mxu0 0.0
    %478 = vmatprep.subr.mxu0 0.0
    %479 = vmatpush1.msra.mxu0 0.0
    %480 = vmatprep.subr.mxu0 0.0
    %481 = vmatpush1.msra.mxu0 0.0
    %482 = vmatprep.subr.mxu0 0.0
    %483 = vmatpush1.msra.mxu0 0.0
    %484 = vmatprep.subr.mxu0 0.0
    %485 = vmatpush1.msra.mxu0 0.0
    %486 = vmatprep.subr.mxu0 0.0
    %487 = vmatpush1.msra.mxu0 0.0
    %488 = vmatprep.mubr.f32.mxu0 0.0
    %489 = vmatmul.mubr.f32.gmra.mrb[0].mxu0 %v419
    %v490 = vpop.f32.mrb[0].mxu0
    %v491 = vadd.f32 0.0, %v490
    %v492 = vpop.f32.mrb[0].mxu0
    %493 = vmatprep.mubr.f32.mxu0 0.0
    %494 = vmatmul.mubr.f32.gmra.mrb[0].mxu0 %v422
    %v495 = vpop.f32.mrb[0].mxu0
    %v496 = vadd.f32 0.0, %v495
    %v497 = vpop.f32.mrb[0].mxu0
    %498 = vdwg.mxu0
    %499 = vrot.lane.b32.xlu0 %v403, 126
    %v500 = vpop.permute.xlu0 %499
    %501 = vrot.lane.b32.xlu0 %v404, 126
    %v502 = vpop.permute.xlu0 %501
    %v506 = vsel %vm417, %v405, 0
    %v509 = vsel %vm417, %v406, 0
    %511 = vmatprep.subr.mxu0 0.0
    %512 = vmatpush1.msra.mxu0 %v500
    %513 = vmatprep.subr.mxu0 0.0
    %514 = vmatpush1.msra.mxu0 %v502
    %515 = vmatprep.subr.mxu0 0.0
    %516 = vmatpush1.msra.mxu0 0.0
    %517 = vmatprep.subr.mxu0 0.0
    %518 = vmatpush1.msra.mxu0 0.0
    %519 = vmatprep.subr.mxu0 0.0
    %520 = vmatpush1.msra.mxu0 0.0
    %521 = vmatprep.subr.mxu0 0.0
    %522 = vmatpush1.msra.mxu0 0.0
    %523 = vmatprep.subr.mxu0 0.0
    %524 = vmatpush1.msra.mxu0 0.0
    %525 = vmatprep.subr.mxu0 0.0
    %526 = vmatpush1.msra.mxu0 0.0
    %527 = vmatprep.subr.mxu0 0.0
    %528 = vmatpush1.msra.mxu0 0.0
    %529 = vmatprep.subr.mxu0 0.0
    %530 = vmatpush1.msra.mxu0 0.0
    %531 = vmatprep.subr.mxu0 0.0
    %532 = vmatpush1.msra.mxu0 0.0
    %533 = vmatprep.subr.mxu0 0.0
    %534 = vmatpush1.msra.mxu0 0.0
    %535 = vmatprep.subr.mxu0 0.0
    %536 = vmatpush1.msra.mxu0 0.0
    %537 = vmatprep.subr.mxu0 0.0
    %538 = vmatpush1.msra.mxu0 0.0
    %539 = vmatprep.subr.mxu0 0.0
    %540 = vmatpush1.msra.mxu0 0.0
    %541 = vmatprep.subr.mxu0 0.0
    %542 = vmatpush1.msra.mxu0 0.0
    %543 = vmatprep.subr.mxu0 0.0
    %544 = vmatpush1.msra.mxu0 0.0
    %545 = vmatprep.subr.mxu0 0.0
    %546 = vmatpush1.msra.mxu0 0.0
    %547 = vmatprep.subr.mxu0 0.0
    %548 = vmatpush1.msra.mxu0 0.0
    %549 = vmatprep.subr.mxu0 0.0
    %550 = vmatpush1.msra.mxu0 0.0
    %551 = vmatprep.subr.mxu0 0.0
    %552 = vmatpush1.msra.mxu0 0.0
    %553 = vmatprep.subr.mxu0 0.0
    %554 = vmatpush1.msra.mxu0 0.0
    %555 = vmatprep.subr.mxu0 0.0
    %556 = vmatpush1.msra.mxu0 0.0
    %557 = vmatprep.subr.mxu0 0.0
    %558 = vmatpush1.msra.mxu0 0.0
    %559 = vmatprep.subr.mxu0 0.0
    %560 = vmatpush1.msra.mxu0 0.0
    %561 = vmatprep.subr.mxu0 0.0
    %562 = vmatpush1.msra.mxu0 0.0
    %563 = vmatprep.subr.mxu0 0.0
    %564 = vmatpush1.msra.mxu0 0.0
    %565 = vmatprep.subr.mxu0 0.0
    %566 = vmatpush1.msra.mxu0 0.0
    %567 = vmatprep.subr.mxu0 0.0
    %568 = vmatpush1.msra.mxu0 0.0
    %569 = vmatprep.subr.mxu0 0.0
    %570 = vmatpush1.msra.mxu0 0.0
    %571 = vmatprep.subr.mxu0 0.0
    %572 = vmatpush1.msra.mxu0 0.0
    %573 = vmatprep.subr.mxu0 0.0
    %574 = vmatpush1.msra.mxu0 0.0
    %575 = vmatprep.mubr.f32.mxu0 0.0
    %576 = vmatmul.mubr.f32.gmra.mrb[0].mxu0 %v506
    %v577 = vpop.f32.mrb[0].mxu0
    %v578 = vadd.f32 %v491, %v577
    %v579 = vpop.f32.mrb[0].mxu0
    %580 = vmatprep.mubr.f32.mxu0 0.0
    %581 = vmatmul.mubr.f32.gmra.mrb[0].mxu0 %v509
    %v582 = vpop.f32.mrb[0].mxu0
    %v583 = vadd.f32 %v496, %v582
    %v584 = vpop.f32.mrb[0].mxu0
    %585 = vdwg.mxu0
    %v586 = vld [vmem:[#allocation6 + $0x80] sm:$0xff]
    %v587 = vld [vmem:[#allocation6 + $0x88] sm:$0xff]
    %588 = vrot.lane.b32.xlu0 %v403, 124
    %v589 = vpop.permute.xlu0 %588
    %590 = vrot.lane.b32.xlu0 %v404, 124
    %v591 = vpop.permute.xlu0 %590
    %v595 = vsel %vm417, %v586, 0
    %v598 = vsel %vm417, %v587, 0
    %600 = vmatprep.subr.mxu0 0.0
    %601 = vmatpush1.msra.mxu0 %v589
    %602 = vmatprep.subr.mxu0 0.0
    %603 = vmatpush1.msra.mxu0 %v591
    %604 = vmatprep.subr.mxu0 0.0
    %605 = vmatpush1.msra.mxu0 0.0
    %606 = vmatprep.subr.mxu0 0.0
    %607 = vmatpush1.msra.mxu0 0.0
    %608 = vmatprep.subr.mxu0 0.0
    %609 = vmatpush1.msra.mxu0 0.0
    %610 = vmatprep.subr.mxu0 0.0
    %611 = vmatpush1.msra.mxu0 0.0
    %612 = vmatprep.subr.mxu0 0.0
    %613 = vmatpush1.msra.mxu0 0.0
    %614 = vmatprep.subr.mxu0 0.0
    %615 = vmatpush1.msra.mxu0 0.0
    %616 = vmatprep.subr.mxu0 0.0
    %617 = vmatpush1.msra.mxu0 0.0
    %618 = vmatprep.subr.mxu0 0.0
    %619 = vmatpush1.msra.mxu0 0.0
    %620 = vmatprep.subr.mxu0 0.0
    %621 = vmatpush1.msra.mxu0 0.0
    %622 = vmatprep.subr.mxu0 0.0
    %623 = vmatpush1.msra.mxu0 0.0
    %624 = vmatprep.subr.mxu0 0.0
    %625 = vmatpush1.msra.mxu0 0.0
    %626 = vmatprep.subr.mxu0 0.0
    %627 = vmatpush1.msra.mxu0 0.0
    %628 = vmatprep.subr.mxu0 0.0
    %629 = vmatpush1.msra.mxu0 0.0
    %630 = vmatprep.subr.mxu0 0.0
    %631 = vmatpush1.msra.mxu0 0.0
    %632 = vmatprep.subr.mxu0 0.0
    %633 = vmatpush1.msra.mxu0 0.0
    %634 = vmatprep.subr.mxu0 0.0
    %635 = vmatpush1.msra.mxu0 0.0
    %636 = vmatprep.subr.mxu0 0.0
    %637 = vmatpush1.msra.mxu0 0.0
    %638 = vmatprep.subr.mxu0 0.0
    %639 = vmatpush1.msra.mxu0 0.0
    %640 = vmatprep.subr.mxu0 0.0
    %641 = vmatpush1.msra.mxu0 0.0
    %642 = vmatprep.subr.mxu0 0.0
    %643 = vmatpush1.msra.mxu0 0.0
    %644 = vmatprep.subr.mxu0 0.0
    %645 = vmatpush1.msra.mxu0 0.0
    %646 = vmatprep.subr.mxu0 0.0
    %647 = vmatpush1.msra.mxu0 0.0
    %648 = vmatprep.subr.mxu0 0.0
    %649 = vmatpush1.msra.mxu0 0.0
    %650 = vmatprep.subr.mxu0 0.0
    %651 = vmatpush1.msra.mxu0 0.0
    %652 = vmatprep.subr.mxu0 0.0
    %653 = vmatpush1.msra.mxu0 0.0
    %654 = vmatprep.subr.mxu0 0.0
    %655 = vmatpush1.msra.mxu0 0.0
    %656 = vmatprep.subr.mxu0 0.0
    %657 = vmatpush1.msra.mxu0 0.0
    %658 = vmatprep.subr.mxu0 0.0
    %659 = vmatpush1.msra.mxu0 0.0
    %660 = vmatprep.subr.mxu0 0.0
    %661 = vmatpush1.msra.mxu0 0.0
    %662 = vmatprep.subr.mxu0 0.0
    %663 = vmatpush1.msra.mxu0 0.0
    %664 = vmatprep.mubr.f32.mxu0 0.0
    %665 = vmatmul.mubr.f32.gmra.mrb[0].mxu0 %v595
    %v666 = vpop.f32.mrb[0].mxu0
    %v667 = vadd.f32 0.0, %v666
    %v668 = vpop.f32.mrb[0].mxu0
    %669 = vmatprep.mubr.f32.mxu0 0.0
    %670 = vmatmul.mubr.f32.gmra.mrb[0].mxu0 %v598
    %v671 = vpop.f32.mrb[0].mxu0
    %v672 = vadd.f32 0.0, %v671
    %v673 = vpop.f32.mrb[0].mxu0
    %674 = vdwg.mxu0
    %v675 = vadd.f32 %v578, %v667
    %v676 = vadd.f32 %v583, %v672
    %677 = vset.pattern.permute.xlu0 16
    %678 = vperm.xlu0 %677, %v405
    %v679 = vpop.permute.xlu0 %678
    %681 = vset.pattern.permute.xlu0 16
    %682 = vperm.xlu0 %681, %v406
    %v683 = vpop.permute.xlu0 %682
    %v685 = vadd.f32 %v675, %v679
    %v686 = vadd.f32 %v676, %v683
    %v687 = vmax.f32 %v685, 0.0
    %v688 = vmax.f32 %v686, 0.0
    %v689 = vadd.f32 %v687, %v389
    %v690 = vadd.f32 %v688, %v390
    %v691 = vmax.f32 %v689, 0.0
    %v692 = vmax.f32 %v690, 0.0
    %695 = vrot.lane.b32.xlu0 %v691, 4
    %v696 = vpop.permute.xlu0 %695
    %697 = vrot.lane.b32.xlu0 %v692, 4
    %v698 = vpop.permute.xlu0 %697
    %701 = vst.msk [vmem:[#allocation2] sm:$0xff] %vm50, %v696
    %702 = vst.msk [vmem:[#allocation2 + $0x8] sm:$0xff] %vm50, %v698
    %v703 = vld [vmem:[#allocation2] sm:$0xff]
    %v704 = vld [vmem:[#allocation2 + $0x8] sm:$0xff]
    %v705 = vld [vmem:[#allocation6 + $0x90] sm:$0xff]
    %v706 = vld [vmem:[#allocation6 + $0x98] sm:$0xff]
    %v707 = vld [vmem:[#allocation6 + $0xa0] sm:$0xff]
    %v708 = vld [vmem:[#allocation6 + $0xa8] sm:$0xff]
    %711 = vrot.lane.b32.xlu0 %v703, 126
    %v712 = vpop.permute.xlu0 %711
    %713 = vrot.lane.b32.xlu0 %v704, 126
    %v714 = vpop.permute.xlu0 %713
    %v718 = vsel %vm417, %v707, 0
    %v721 = vsel %vm417, %v708, 0
    %723 = vmatprep.subr.mxu0 0.0
    %724 = vmatpush1.msra.mxu0 %v712
    %725 = vmatprep.subr.mxu0 0.0
    %726 = vmatpush1.msra.mxu0 %v714
    %727 = vmatprep.subr.mxu0 0.0
    %728 = vmatpush1.msra.mxu0 0.0
    %729 = vmatprep.subr.mxu0 0.0
    %730 = vmatpush1.msra.mxu0 0.0
    %731 = vmatprep.subr.mxu0 0.0
    %732 = vmatpush1.msra.mxu0 0.0
    %733 = vmatprep.subr.mxu0 0.0
    %734 = vmatpush1.msra.mxu0 0.0
    %735 = vmatprep.subr.mxu0 0.0
    %736 = vmatpush1.msra.mxu0 0.0
    %737 = vmatprep.subr.mxu0 0.0
    %738 = vmatpush1.msra.mxu0 0.0
    %739 = vmatprep.subr.mxu0 0.0
    %740 = vmatpush1.msra.mxu0 0.0
    %741 = vmatprep.subr.mxu0 0.0
    %742 = vmatpush1.msra.mxu0 0.0
    %743 = vmatprep.subr.mxu0 0.0
    %744 = vmatpush1.msra.mxu0 0.0
    %745 = vmatprep.subr.mxu0 0.0
    %746 = vmatpush1.msra.mxu0 0.0
    %747 = vmatprep.subr.mxu0 0.0
    %748 = vmatpush1.msra.mxu0 0.0
    %749 = vmatprep.subr.mxu0 0.0
    %750 = vmatpush1.msra.mxu0 0.0
    %751 = vmatprep.subr.mxu0 0.0
    %752 = vmatpush1.msra.mxu0 0.0
    %753 = vmatprep.subr.mxu0 0.0
    %754 = vmatpush1.msra.mxu0 0.0
    %755 = vmatprep.subr.mxu0 0.0
    %756 = vmatpush1.msra.mxu0 0.0
    %757 = vmatprep.subr.mxu0 0.0
    %758 = vmatpush1.msra.mxu0 0.0
    %759 = vmatprep.subr.mxu0 0.0
    %760 = vmatpush1.msra.mxu0 0.0
    %761 = vmatprep.subr.mxu0 0.0
    %762 = vmatpush1.msra.mxu0 0.0
    %763 = vmatprep.subr.mxu0 0.0
    %764 = vmatpush1.msra.mxu0 0.0
    %765 = vmatprep.subr.mxu0 0.0
    %766 = vmatpush1.msra.mxu0 0.0
    %767 = vmatprep.subr.mxu0 0.0
    %768 = vmatpush1.msra.mxu0 0.0
    %769 = vmatprep.subr.mxu0 0.0
    %770 = vmatpush1.msra.mxu0 0.0
    %771 = vmatprep.subr.mxu0 0.0
    %772 = vmatpush1.msra.mxu0 0.0
    %773 = vmatprep.subr.mxu0 0.0
    %774 = vmatpush1.msra.mxu0 0.0
    %775 = vmatprep.subr.mxu0 0.0
    %776 = vmatpush1.msra.mxu0 0.0
    %777 = vmatprep.subr.mxu0 0.0
    %778 = vmatpush1.msra.mxu0 0.0
    %779 = vmatprep.subr.mxu0 0.0
    %780 = vmatpush1.msra.mxu0 0.0
    %781 = vmatprep.subr.mxu0 0.0
    %782 = vmatpush1.msra.mxu0 0.0
    %783 = vmatprep.subr.mxu0 0.0
    %784 = vmatpush1.msra.mxu0 0.0
    %785 = vmatprep.subr.mxu0 0.0
    %786 = vmatpush1.msra.mxu0 0.0
    %787 = vmatprep.mubr.f32.mxu0 0.0
    %788 = vmatmul.mubr.f32.gmra.mrb[0].mxu0 %v718
    %v789 = vpop.f32.mrb[0].mxu0
    %v790 = vadd.f32 0.0, %v789
    %v791 = vpop.f32.mrb[0].mxu0
    %792 = vmatprep.mubr.f32.mxu0 0.0
    %793 = vmatmul.mubr.f32.gmra.mrb[0].mxu0 %v721
    %v794 = vpop.f32.mrb[0].mxu0
    %v795 = vadd.f32 0.0, %v794
    %v796 = vpop.f32.mrb[0].mxu0
    %797 = vdwg.mxu0
    %v799 = vsel %vm417, %v705, 0
    %v802 = vsel %vm417, %v706, 0
    %804 = vmatprep.subr.mxu0 0.0
    %805 = vmatpush1.msra.mxu0 %v703
    %806 = vmatprep.subr.mxu0 0.0
    %807 = vmatpush1.msra.mxu0 %v704
    %808 = vmatprep.subr.mxu0 0.0
    %809 = vmatpush1.msra.mxu0 0.0
    %810 = vmatprep.subr.mxu0 0.0
    %811 = vmatpush1.msra.mxu0 0.0
    %812 = vmatprep.subr.mxu0 0.0
    %813 = vmatpush1.msra.mxu0 0.0
    %814 = vmatprep.subr.mxu0 0.0
    %815 = vmatpush1.msra.mxu0 0.0
    %816 = vmatprep.subr.mxu0 0.0
    %817 = vmatpush1.msra.mxu0 0.0
    %818 = vmatprep.subr.mxu0 0.0
    %819 = vmatpush1.msra.mxu0 0.0
    %820 = vmatprep.subr.mxu0 0.0
    %821 = vmatpush1.msra.mxu0 0.0
    %822 = vmatprep.subr.mxu0 0.0
    %823 = vmatpush1.msra.mxu0 0.0
    %824 = vmatprep.subr.mxu0 0.0
    %825 = vmatpush1.msra.mxu0 0.0
    %826 = vmatprep.subr.mxu0 0.0
    %827 = vmatpush1.msra.mxu0 0.0
    %828 = vmatprep.subr.mxu0 0.0
    %829 = vmatpush1.msra.mxu0 0.0
    %830 = vmatprep.subr.mxu0 0.0
    %831 = vmatpush1.msra.mxu0 0.0
    %832 = vmatprep.subr.mxu0 0.0
    %833 = vmatpush1.msra.mxu0 0.0
    %834 = vmatprep.subr.mxu0 0.0
    %835 = vmatpush1.msra.mxu0 0.0
    %836 = vmatprep.subr.mxu0 0.0
    %837 = vmatpush1.msra.mxu0 0.0
    %838 = vmatprep.subr.mxu0 0.0
    %839 = vmatpush1.msra.mxu0 0.0
    %840 = vmatprep.subr.mxu0 0.0
    %841 = vmatpush1.msra.mxu0 0.0
    %842 = vmatprep.subr.mxu0 0.0
    %843 = vmatpush1.msra.mxu0 0.0
    %844 = vmatprep.subr.mxu0 0.0
    %845 = vmatpush1.msra.mxu0 0.0
    %846 = vmatprep.subr.mxu0 0.0
    %847 = vmatpush1.msra.mxu0 0.0
    %848 = vmatprep.subr.mxu0 0.0
    %849 = vmatpush1.msra.mxu0 0.0
    %850 = vmatprep.subr.mxu0 0.0
    %851 = vmatpush1.msra.mxu0 0.0
    %852 = vmatprep.subr.mxu0 0.0
    %853 = vmatpush1.msra.mxu0 0.0
    %854 = vmatprep.subr.mxu0 0.0
    %855 = vmatpush1.msra.mxu0 0.0
    %856 = vmatprep.subr.mxu0 0.0
    %857 = vmatpush1.msra.mxu0 0.0
    %858 = vmatprep.subr.mxu0 0.0
    %859 = vmatpush1.msra.mxu0 0.0
    %860 = vmatprep.subr.mxu0 0.0
    %861 = vmatpush1.msra.mxu0 0.0
    %862 = vmatprep.subr.mxu0 0.0
    %863 = vmatpush1.msra.mxu0 0.0
    %864 = vmatprep.subr.mxu0 0.0
    %865 = vmatpush1.msra.mxu0 0.0
    %866 = vmatprep.subr.mxu0 0.0
    %867 = vmatpush1.msra.mxu0 0.0
    %868 = vmatprep.mubr.f32.mxu0 0.0
    %869 = vmatmul.mubr.f32.gmra.mrb[0].mxu0 %v799
    %v870 = vpop.f32.mrb[0].mxu0
    %v871 = vadd.f32 %v790, %v870
    %v872 = vpop.f32.mrb[0].mxu0
    %873 = vmatprep.mubr.f32.mxu0 0.0
    %874 = vmatmul.mubr.f32.gmra.mrb[0].mxu0 %v802
    %v875 = vpop.f32.mrb[0].mxu0
    %v876 = vadd.f32 %v795, %v875
    %v877 = vpop.f32.mrb[0].mxu0
    %878 = vdwg.mxu0
    %v879 = vld [vmem:[#allocation6 + $0xb0] sm:$0xff]
    %v880 = vld [vmem:[#allocation6 + $0xb8] sm:$0xff]
    %881 = vrot.lane.b32.xlu0 %v703, 124
    %v882 = vpop.permute.xlu0 %881
    %883 = vrot.lane.b32.xlu0 %v704, 124
    %v884 = vpop.permute.xlu0 %883
    %v888 = vsel %vm417, %v879, 0
    %v891 = vsel %vm417, %v880, 0
    %893 = vmatprep.subr.mxu0 0.0
    %894 = vmatpush1.msra.mxu0 %v882
    %895 = vmatprep.subr.mxu0 0.0
    %896 = vmatpush1.msra.mxu0 %v884
    %897 = vmatprep.subr.mxu0 0.0
    %898 = vmatpush1.msra.mxu0 0.0
    %899 = vmatprep.subr.mxu0 0.0
    %900 = vmatpush1.msra.mxu0 0.0
    %901 = vmatprep.subr.mxu0 0.0
    %902 = vmatpush1.msra.mxu0 0.0
    %903 = vmatprep.subr.mxu0 0.0
    %904 = vmatpush1.msra.mxu0 0.0
    %905 = vmatprep.subr.mxu0 0.0
    %906 = vmatpush1.msra.mxu0 0.0
    %907 = vmatprep.subr.mxu0 0.0
    %908 = vmatpush1.msra.mxu0 0.0
    %909 = vmatprep.subr.mxu0 0.0
    %910 = vmatpush1.msra.mxu0 0.0
    %911 = vmatprep.subr.mxu0 0.0
    %912 = vmatpush1.msra.mxu0 0.0
    %913 = vmatprep.subr.mxu0 0.0
    %914 = vmatpush1.msra.mxu0 0.0
    %915 = vmatprep.subr.mxu0 0.0
    %916 = vmatpush1.msra.mxu0 0.0
    %917 = vmatprep.subr.mxu0 0.0
    %918 = vmatpush1.msra.mxu0 0.0
    %919 = vmatprep.subr.mxu0 0.0
    %920 = vmatpush1.msra.mxu0 0.0
    %921 = vmatprep.subr.mxu0 0.0
    %922 = vmatpush1.msra.mxu0 0.0
    %923 = vmatprep.subr.mxu0 0.0
    %924 = vmatpush1.msra.mxu0 0.0
    %925 = vmatprep.subr.mxu0 0.0
    %926 = vmatpush1.msra.mxu0 0.0
    %927 = vmatprep.subr.mxu0 0.0
    %928 = vmatpush1.msra.mxu0 0.0
    %929 = vmatprep.subr.mxu0 0.0
    %930 = vmatpush1.msra.mxu0 0.0
    %931 = vmatprep.subr.mxu0 0.0
    %932 = vmatpush1.msra.mxu0 0.0
    %933 = vmatprep.subr.mxu0 0.0
    %934 = vmatpush1.msra.mxu0 0.0
    %935 = vmatprep.subr.mxu0 0.0
    %936 = vmatpush1.msra.mxu0 0.0
    %937 = vmatprep.subr.mxu0 0.0
    %938 = vmatpush1.msra.mxu0 0.0
    %939 = vmatprep.subr.mxu0 0.0
    %940 = vmatpush1.msra.mxu0 0.0
    %941 = vmatprep.subr.mxu0 0.0
    %942 = vmatpush1.msra.mxu0 0.0
    %943 = vmatprep.subr.mxu0 0.0
    %944 = vmatpush1.msra.mxu0 0.0
    %945 = vmatprep.subr.mxu0 0.0
    %946 = vmatpush1.msra.mxu0 0.0
    %947 = vmatprep.subr.mxu0 0.0
    %948 = vmatpush1.msra.mxu0 0.0
    %949 = vmatprep.subr.mxu0 0.0
    %950 = vmatpush1.msra.mxu0 0.0
    %951 = vmatprep.subr.mxu0 0.0
    %952 = vmatpush1.msra.mxu0 0.0
    %953 = vmatprep.subr.mxu0 0.0
    %954 = vmatpush1.msra.mxu0 0.0
    %955 = vmatprep.subr.mxu0 0.0
    %956 = vmatpush1.msra.mxu0 0.0
    %957 = vmatprep.mubr.f32.mxu0 0.0
    %958 = vmatmul.mubr.f32.gmra.mrb[0].mxu0 %v888
    %v959 = vpop.f32.mrb[0].mxu0
    %v960 = vadd.f32 0.0, %v959
    %v961 = vpop.f32.mrb[0].mxu0
    %962 = vmatprep.mubr.f32.mxu0 0.0
    %963 = vmatmul.mubr.f32.gmra.mrb[0].mxu0 %v891
    %v964 = vpop.f32.mrb[0].mxu0
    %v965 = vadd.f32 0.0, %v964
    %v966 = vpop.f32.mrb[0].mxu0
    %967 = vdwg.mxu0
    %v968 = vadd.f32 %v871, %v960
    %v969 = vadd.f32 %v876, %v965
    %970 = vset.pattern.permute.xlu0 16
    %971 = vperm.xlu0 %970, %v705
    %v972 = vpop.permute.xlu0 %971
    %974 = vset.pattern.permute.xlu0 16
    %975 = vperm.xlu0 %974, %v706
    %v976 = vpop.permute.xlu0 %975
    %v978 = vadd.f32 %v968, %v972
    %v979 = vadd.f32 %v969, %v976
    %v980 = vmax.f32 %v978, 0.0
    %v981 = vmax.f32 %v979, 0.0
    %984 = vrot.lane.b32.xlu0 %v980, 4
    %v985 = vpop.permute.xlu0 %984
    %986 = vrot.lane.b32.xlu0 %v981, 4
    %v987 = vpop.permute.xlu0 %986
    %990 = vst.msk [vmem:[#allocation2] sm:$0xff] %vm50, %v985
    %991 = vst.msk [vmem:[#allocation2 + $0x8] sm:$0xff] %vm50, %v987
    %v992 = vld [vmem:[#allocation2] sm:$0xff]
    %v993 = vld [vmem:[#allocation2 + $0x8] sm:$0xff]
    %v994 = vld [vmem:[#allocation6 + $0xc0] sm:$0xff]
    %v995 = vld [vmem:[#allocation6 + $0xc8] sm:$0xff]
    %v996 = vld [vmem:[#allocation6 + $0xd0] sm:$0xff]
    %v997 = vld [vmem:[#allocation6 + $0xd8] sm:$0xff]
    %1000 = vrot.lane.b32.xlu0 %v992, 126
    %v1001 = vpop.permute.xlu0 %1000
    %1002 = vrot.lane.b32.xlu0 %v993, 126
    %v1003 = vpop.permute.xlu0 %1002
    %v1007 = vsel %vm417, %v996, 0
    %v1010 = vsel %vm417, %v997, 0
    %1012 = vmatprep.subr.mxu0 0.0
    %1013 = vmatpush1.msra.mxu0 %v1001
    %1014 = vmatprep.subr.mxu0 0.0
    %1015 = vmatpush1.msra.mxu0 %v1003
    %1016 = vmatprep.subr.mxu0 0.0
    %1017 = vmatpush1.msra.mxu0 0.0
    %1018 = vmatprep.subr.mxu0 0.0
    %1019 = vmatpush1.msra.mxu0 0.0
    %1020 = vmatprep.subr.mxu0 0.0
    %1021 = vmatpush1.msra.mxu0 0.0
    %1022 = vmatprep.subr.mxu0 0.0
    %1023 = vmatpush1.msra.mxu0 0.0
    %1024 = vmatprep.subr.mxu0 0.0
    %1025 = vmatpush1.msra.mxu0 0.0
    %1026 = vmatprep.subr.mxu0 0.0
    %1027 = vmatpush1.msra.mxu0 0.0
    %1028 = vmatprep.subr.mxu0 0.0
    %1029 = vmatpush1.msra.mxu0 0.0
    %1030 = vmatprep.subr.mxu0 0.0
    %1031 = vmatpush1.msra.mxu0 0.0
    %1032 = vmatprep.subr.mxu0 0.0
    %1033 = vmatpush1.msra.mxu0 0.0
    %1034 = vmatprep.subr.mxu0 0.0
    %1035 = vmatpush1.msra.mxu0 0.0
    %1036 = vmatprep.subr.mxu0 0.0
    %1037 = vmatpush1.msra.mxu0 0.0
    %1038 = vmatprep.subr.mxu0 0.0
    %1039 = vmatpush1.msra.mxu0 0.0
    %1040 = vmatprep.subr.mxu0 0.0
    %1041 = vmatpush1.msra.mxu0 0.0
    %1042 = vmatprep.subr.mxu0 0.0
    %1043 = vmatpush1.msra.mxu0 0.0
    %1044 = vmatprep.subr.mxu0 0.0
    %1045 = vmatpush1.msra.mxu0 0.0
    %1046 = vmatprep.subr.mxu0 0.0
    %1047 = vmatpush1.msra.mxu0 0.0
    %1048 = vmatprep.subr.mxu0 0.0
    %1049 = vmatpush1.msra.mxu0 0.0
    %1050 = vmatprep.subr.mxu0 0.0
    %1051 = vmatpush1.msra.mxu0 0.0
    %1052 = vmatprep.subr.mxu0 0.0
    %1053 = vmatpush1.msra.mxu0 0.0
    %1054 = vmatprep.subr.mxu0 0.0
    %1055 = vmatpush1.msra.mxu0 0.0
    %1056 = vmatprep.subr.mxu0 0.0
    %1057 = vmatpush1.msra.mxu0 0.0
    %1058 = vmatprep.subr.mxu0 0.0
    %1059 = vmatpush1.msra.mxu0 0.0
    %1060 = vmatprep.subr.mxu0 0.0
    %1061 = vmatpush1.msra.mxu0 0.0
    %1062 = vmatprep.subr.mxu0 0.0
    %1063 = vmatpush1.msra.mxu0 0.0
    %1064 = vmatprep.subr.mxu0 0.0
    %1065 = vmatpush1.msra.mxu0 0.0
    %1066 = vmatprep.subr.mxu0 0.0
    %1067 = vmatpush1.msra.mxu0 0.0
    %1068 = vmatprep.subr.mxu0 0.0
    %1069 = vmatpush1.msra.mxu0 0.0
    %1070 = vmatprep.subr.mxu0 0.0
    %1071 = vmatpush1.msra.mxu0 0.0
    %1072 = vmatprep.subr.mxu0 0.0
    %1073 = vmatpush1.msra.mxu0 0.0
    %1074 = vmatprep.subr.mxu0 0.0
    %1075 = vmatpush1.msra.mxu0 0.0
    %1076 = vmatprep.mubr.f32.mxu0 0.0
    %1077 = vmatmul.mubr.f32.gmra.mrb[0].mxu0 %v1007
    %v1078 = vpop.f32.mrb[0].mxu0
    %v1079 = vadd.f32 0.0, %v1078
    %v1080 = vpop.f32.mrb[0].mxu0
    %1081 = vmatprep.mubr.f32.mxu0 0.0
    %1082 = vmatmul.mubr.f32.gmra.mrb[0].mxu0 %v1010
    %v1083 = vpop.f32.mrb[0].mxu0
    %v1084 = vadd.f32 0.0, %v1083
    %v1085 = vpop.f32.mrb[0].mxu0
    %1086 = vdwg.mxu0
    %v1088 = vsel %vm417, %v994, 0
    %v1091 = vsel %vm417, %v995, 0
    %1093 = vmatprep.subr.mxu0 0.0
    %1094 = vmatpush1.msra.mxu0 %v992
    %1095 = vmatprep.subr.mxu0 0.0
    %1096 = vmatpush1.msra.mxu0 %v993
    %1097 = vmatprep.subr.mxu0 0.0
    %1098 = vmatpush1.msra.mxu0 0.0
    %1099 = vmatprep.subr.mxu0 0.0
    %1100 = vmatpush1.msra.mxu0 0.0
    %1101 = vmatprep.subr.mxu0 0.0
    %1102 = vmatpush1.msra.mxu0 0.0
    %1103 = vmatprep.subr.mxu0 0.0
    %1104 = vmatpush1.msra.mxu0 0.0
    %1105 = vmatprep.subr.mxu0 0.0
    %1106 = vmatpush1.msra.mxu0 0.0
    %1107 = vmatprep.subr.mxu0 0.0
    %1108 = vmatpush1.msra.mxu0 0.0
    %1109 = vmatprep.subr.mxu0 0.0
    %1110 = vmatpush1.msra.mxu0 0.0
    %1111 = vmatprep.subr.mxu0 0.0
    %1112 = vmatpush1.msra.mxu0 0.0
    %1113 = vmatprep.subr.mxu0 0.0
    %1114 = vmatpush1.msra.mxu0 0.0
    %1115 = vmatprep.subr.mxu0 0.0
    %1116 = vmatpush1.msra.mxu0 0.0
    %1117 = vmatprep.subr.mxu0 0.0
    %1118 = vmatpush1.msra.mxu0 0.0
    %1119 = vmatprep.subr.mxu0 0.0
    %1120 = vmatpush1.msra.mxu0 0.0
    %1121 = vmatprep.subr.mxu0 0.0
    %1122 = vmatpush1.msra.mxu0 0.0
    %1123 = vmatprep.subr.mxu0 0.0
    %1124 = vmatpush1.msra.mxu0 0.0
    %1125 = vmatprep.subr.mxu0 0.0
    %1126 = vmatpush1.msra.mxu0 0.0
    %1127 = vmatprep.subr.mxu0 0.0
    %1128 = vmatpush1.msra.mxu0 0.0
    %1129 = vmatprep.subr.mxu0 0.0
    %1130 = vmatpush1.msra.mxu0 0.0
    %1131 = vmatprep.subr.mxu0 0.0
    %1132 = vmatpush1.msra.mxu0 0.0
    %1133 = vmatprep.subr.mxu0 0.0
    %1134 = vmatpush1.msra.mxu0 0.0
    %1135 = vmatprep.subr.mxu0 0.0
    %1136 = vmatpush1.msra.mxu0 0.0
    %1137 = vmatprep.subr.mxu0 0.0
    %1138 = vmatpush1.msra.mxu0 0.0
    %1139 = vmatprep.subr.mxu0 0.0
    %1140 = vmatpush1.msra.mxu0 0.0
    %1141 = vmatprep.subr.mxu0 0.0
    %1142 = vmatpush1.msra.mxu0 0.0
    %1143 = vmatprep.subr.mxu0 0.0
    %1144 = vmatpush1.msra.mxu0 0.0
    %1145 = vmatprep.subr.mxu0 0.0
    %1146 = vmatpush1.msra.mxu0 0.0
    %1147 = vmatprep.subr.mxu0 0.0
    %1148 = vmatpush1.msra.mxu0 0.0
    %1149 = vmatprep.subr.mxu0 0.0
    %1150 = vmatpush1.msra.mxu0 0.0
    %1151 = vmatprep.subr.mxu0 0.0
    %1152 = vmatpush1.msra.mxu0 0.0
    %1153 = vmatprep.subr.mxu0 0.0
    %1154 = vmatpush1.msra.mxu0 0.0
    %1155 = vmatprep.subr.mxu0 0.0
    %1156 = vmatpush1.msra.mxu0 0.0
    %1157 = vmatprep.mubr.f32.mxu0 0.0
    %1158 = vmatmul.mubr.f32.gmra.mrb[0].mxu0 %v1088
    %v1159 = vpop.f32.mrb[0].mxu0
    %v1160 = vadd.f32 %v1079, %v1159
    %v1161 = vpop.f32.mrb[0].mxu0
    %1162 = vmatprep.mubr.f32.mxu0 0.0
    %1163 = vmatmul.mubr.f32.gmra.mrb[0].mxu0 %v1091
    %v1164 = vpop.f32.mrb[0].mxu0
    %v1165 = vadd.f32 %v1084, %v1164
    %v1166 = vpop.f32.mrb[0].mxu0
    %1167 = vdwg.mxu0
    %v1168 = vld [vmem:[#allocation6 + $0xe0] sm:$0xff]
    %v1169 = vld [vmem:[#allocation6 + $0xe8] sm:$0xff]
    %1170 = vrot.lane.b32.xlu0 %v992, 124
    %v1171 = vpop.permute.xlu0 %1170
    %1172 = vrot.lane.b32.xlu0 %v993, 124
    %v1173 = vpop.permute.xlu0 %1172
    %v1177 = vsel %vm417, %v1168, 0
    %v1180 = vsel %vm417, %v1169, 0
    %1182 = vmatprep.subr.mxu0 0.0
    %1183 = vmatpush1.msra.mxu0 %v1171
    %1184 = vmatprep.subr.mxu0 0.0
    %1185 = vmatpush1.msra.mxu0 %v1173
    %1186 = vmatprep.subr.mxu0 0.0
    %1187 = vmatpush1.msra.mxu0 0.0
    %1188 = vmatprep.subr.mxu0 0.0
    %1189 = vmatpush1.msra.mxu0 0.0
    %1190 = vmatprep.subr.mxu0 0.0
    %1191 = vmatpush1.msra.mxu0 0.0
    %1192 = vmatprep.subr.mxu0 0.0
    %1193 = vmatpush1.msra.mxu0 0.0
    %1194 = vmatprep.subr.mxu0 0.0
    %1195 = vmatpush1.msra.mxu0 0.0
    %1196 = vmatprep.subr.mxu0 0.0
    %1197 = vmatpush1.msra.mxu0 0.0
    %1198 = vmatprep.subr.mxu0 0.0
    %1199 = vmatpush1.msra.mxu0 0.0
    %1200 = vmatprep.subr.mxu0 0.0
    %1201 = vmatpush1.msra.mxu0 0.0
    %1202 = vmatprep.subr.mxu0 0.0
    %1203 = vmatpush1.msra.mxu0 0.0
    %1204 = vmatprep.subr.mxu0 0.0
    %1205 = vmatpush1.msra.mxu0 0.0
    %1206 = vmatprep.subr.mxu0 0.0
    %1207 = vmatpush1.msra.mxu0 0.0
    %1208 = vmatprep.subr.mxu0 0.0
    %1209 = vmatpush1.msra.mxu0 0.0
    %1210 = vmatprep.subr.mxu0 0.0
    %1211 = vmatpush1.msra.mxu0 0.0
    %1212 = vmatprep.subr.mxu0 0.0
    %1213 = vmatpush1.msra.mxu0 0.0
    %1214 = vmatprep.subr.mxu0 0.0
    %1215 = vmatpush1.msra.mxu0 0.0
    %1216 = vmatprep.subr.mxu0 0.0
    %1217 = vmatpush1.msra.mxu0 0.0
    %1218 = vmatprep.subr.mxu0 0.0
    %1219 = vmatpush1.msra.mxu0 0.0
    %1220 = vmatprep.subr.mxu0 0.0
    %1221 = vmatpush1.msra.mxu0 0.0
    %1222 = vmatprep.subr.mxu0 0.0
    %1223 = vmatpush1.msra.mxu0 0.0
    %1224 = vmatprep.subr.mxu0 0.0
    %1225 = vmatpush1.msra.mxu0 0.0
    %1226 = vmatprep.subr.mxu0 0.0
    %1227 = vmatpush1.msra.mxu0 0.0
    %1228 = vmatprep.subr.mxu0 0.0
    %1229 = vmatpush1.msra.mxu0 0.0
    %1230 = vmatprep.subr.mxu0 0.0
    %1231 = vmatpush1.msra.mxu0 0.0
    %1232 = vmatprep.subr.mxu0 0.0
    %1233 = vmatpush1.msra.mxu0 0.0
    %1234 = vmatprep.subr.mxu0 0.0
    %1235 = vmatpush1.msra.mxu0 0.0
    %1236 = vmatprep.subr.mxu0 0.0
    %1237 = vmatpush1.msra.mxu0 0.0
    %1238 = vmatprep.subr.mxu0 0.0
    %1239 = vmatpush1.msra.mxu0 0.0
    %1240 = vmatprep.subr.mxu0 0.0
    %1241 = vmatpush1.msra.mxu0 0.0
    %1242 = vmatprep.subr.mxu0 0.0
    %1243 = vmatpush1.msra.mxu0 0.0
    %1244 = vmatprep.subr.mxu0 0.0
    %1245 = vmatpush1.msra.mxu0 0.0
    %1246 = vmatprep.mubr.f32.mxu0 0.0
    %1247 = vmatmul.mubr.f32.gmra.mrb[0].mxu0 %v1177
    %v1248 = vpop.f32.mrb[0].mxu0
    %v1249 = vadd.f32 0.0, %v1248
    %v1250 = vpop.f32.mrb[0].mxu0
    %1251 = vmatprep.mubr.f32.mxu0 0.0
    %1252 = vmatmul.mubr.f32.gmra.mrb[0].mxu0 %v1180
    %v1253 = vpop.f32.mrb[0].mxu0
    %v1254 = vadd.f32 0.0, %v1253
    %v1255 = vpop.f32.mrb[0].mxu0
    %1256 = vdwg.mxu0
    %v1257 = vadd.f32 %v1160, %v1249
    %v1258 = vadd.f32 %v1165, %v1254
    %1259 = vset.pattern.permute.xlu0 16
    %1260 = vperm.xlu0 %1259, %v994
    %v1261 = vpop.permute.xlu0 %1260
    %1263 = vset.pattern.permute.xlu0 16
    %1264 = vperm.xlu0 %1263, %v995
    %v1265 = vpop.permute.xlu0 %1264
    %v1267 = vadd.f32 %v1257, %v1261
    %v1268 = vadd.f32 %v1258, %v1265
    %v1269 = vmax.f32 %v1267, 0.0
    %v1270 = vmax.f32 %v1268, 0.0
    %v1271 = vadd.f32 %v1269, %v691
    %v1272 = vadd.f32 %v1270, %v692
    %v1273 = vmax.f32 %v1271, 0.0
    %v1274 = vmax.f32 %v1272, 0.0
    %1275 = vst.msk [vmem:[#allocation8] sm:$0xff] %vm417, %v1273
    %1276 = vst.msk [vmem:[#allocation8 + $0x8] sm:$0xff] %vm417, %v1274
    %s1277 = scalar_lea.vmem [#allocation3], 8
    %v1278 = vld [vmem:[%s1277] sm:$0xff]
    %1280 = vrot.lane.b32.xlu0 %v1278, 4
    %v1281 = vpop.permute.xlu0 %1280
    %1283 = vst.msk [vmem:[#allocation2 + $0x10] sm:$0xff] %vm50, %v1281
    %v1284 = vld [vmem:[#allocation2 + $0x10] sm:$0xff]
    %v1285 = vld [vmem:[#allocation6] sm:$0xff]
    %v1286 = vld [vmem:[#allocation6 + $0x8] sm:$0xff]
    %v1287 = vld [vmem:[#allocation6 + $0x10] sm:$0xff]
    %v1288 = vld [vmem:[#allocation6 + $0x18] sm:$0xff]
    %v1289 = vld [vmem:[#allocation6 + $0x20] sm:$0xff]
    %v1290 = vld [vmem:[#allocation6 + $0x28] sm:$0xff]
    %v1291 = vld [vmem:[#allocation6 + $0x30] sm:$0xff]
    %v1292 = vld [vmem:[#allocation6 + $0x38] sm:$0xff]
    %1294 = vrot.lane.b32.xlu0 %v1284, 125
    %v1295 = vpop.permute.xlu0 %1294
    %v1298 = vsel %vm65, %v1289, 0
    %v1301 = vsel %vm65, %v1290, 0
    %v1304 = vsel %vm65, %v1291, 0
    %v1307 = vsel %vm65, %v1292, 0
    %1309 = vmatprep.subr.mxu0 0.0
    %1310 = vmatpush1.msra.mxu0 %v1295
    %1311 = vmatprep.subr.mxu0 0.0
    %1312 = vmatpush1.msra.mxu0 0.0
    %1313 = vmatprep.subr.mxu0 0.0
    %1314 = vmatpush1.msra.mxu0 0.0
    %1315 = vmatprep.subr.mxu0 0.0
    %1316 = vmatpush1.msra.mxu0 0.0
    %1317 = vmatprep.subr.mxu0 0.0
    %1318 = vmatpush1.msra.mxu0 0.0
    %1319 = vmatprep.subr.mxu0 0.0
    %1320 = vmatpush1.msra.mxu0 0.0
    %1321 = vmatprep.subr.mxu0 0.0
    %1322 = vmatpush1.msra.mxu0 0.0
    %1323 = vmatprep.subr.mxu0 0.0
    %1324 = vmatpush1.msra.mxu0 0.0
    %1325 = vmatprep.subr.mxu0 0.0
    %1326 = vmatpush1.msra.mxu0 0.0
    %1327 = vmatprep.subr.mxu0 0.0
    %1328 = vmatpush1.msra.mxu0 0.0
    %1329 = vmatprep.subr.mxu0 0.0
    %1330 = vmatpush1.msra.mxu0 0.0
    %1331 = vmatprep.subr.mxu0 0.0
    %1332 = vmatpush1.msra.mxu0 0.0
    %1333 = vmatprep.subr.mxu0 0.0
    %1334 = vmatpush1.msra.mxu0 0.0
    %1335 = vmatprep.subr.mxu0 0.0
    %1336 = vmatpush1.msra.mxu0 0.0
    %1337 = vmatprep.subr.mxu0 0.0
    %1338 = vmatpush1.msra.mxu0 0.0
    %1339 = vmatprep.subr.mxu0 0.0
    %1340 = vmatpush1.msra.mxu0 0.0
    %1341 = vmatprep.subr.mxu0 0.0
    %1342 = vmatpush1.msra.mxu0 0.0
    %1343 = vmatprep.subr.mxu0 0.0
    %1344 = vmatpush1.msra.mxu0 0.0
    %1345 = vmatprep.subr.mxu0 0.0
    %1346 = vmatpush1.msra.mxu0 0.0
    %1347 = vmatprep.subr.mxu0 0.0
    %1348 = vmatpush1.msra.mxu0 0.0
    %1349 = vmatprep.subr.mxu0 0.0
    %1350 = vmatpush1.msra.mxu0 0.0
    %1351 = vmatprep.subr.mxu0 0.0
    %1352 = vmatpush1.msra.mxu0 0.0
    %1353 = vmatprep.subr.mxu0 0.0
    %1354 = vmatpush1.msra.mxu0 0.0
    %1355 = vmatprep.subr.mxu0 0.0
    %1356 = vmatpush1.msra.mxu0 0.0
    %1357 = vmatprep.subr.mxu0 0.0
    %1358 = vmatpush1.msra.mxu0 0.0
    %1359 = vmatprep.subr.mxu0 0.0
    %1360 = vmatpush1.msra.mxu0 0.0
    %1361 = vmatprep.subr.mxu0 0.0
    %1362 = vmatpush1.msra.mxu0 0.0
    %1363 = vmatprep.subr.mxu0 0.0
    %1364 = vmatpush1.msra.mxu0 0.0
    %1365 = vmatprep.subr.mxu0 0.0
    %1366 = vmatpush1.msra.mxu0 0.0
    %1367 = vmatprep.subr.mxu0 0.0
    %1368 = vmatpush1.msra.mxu0 0.0
    %1369 = vmatprep.subr.mxu0 0.0
    %1370 = vmatpush1.msra.mxu0 0.0
    %1371 = vmatprep.subr.mxu0 0.0
    %1372 = vmatpush1.msra.mxu0 0.0
    %1373 = vmatprep.mubr.f32.mxu0 0.0
    %1374 = vmatmul.mubr.f32.gmra.mrb[0].mxu0 %v1298
    %v1375 = vpop.f32.mrb[0].mxu0
    %v1376 = vadd.f32 0.0, %v1375
    %v1377 = vpop.f32.mrb[0].mxu0
    %1378 = vmatprep.mubr.f32.mxu0 0.0
    %1379 = vmatmul.mubr.f32.gmra.mrb[0].mxu0 %v1301
    %v1380 = vpop.f32.mrb[0].mxu0
    %v1381 = vadd.f32 0.0, %v1380
    %v1382 = vpop.f32.mrb[0].mxu0
    %1383 = vmatprep.mubr.f32.mxu0 0.0
    %1384 = vmatmul.mubr.f32.gmra.mrb[0].mxu0 %v1304
    %v1385 = vpop.f32.mrb[0].mxu0
    %v1386 = vadd.f32 0.0, %v1385
    %v1387 = vpop.f32.mrb[0].mxu0
    %1388 = vmatprep.mubr.f32.mxu0 0.0
    %1389 = vmatmul.mubr.f32.gmra.mrb[0].mxu0 %v1307
    %v1390 = vpop.f32.mrb[0].mxu0
    %v1391 = vadd.f32 0.0, %v1390
    %v1392 = vpop.f32.mrb[0].mxu0
    %1393 = vdwg.mxu0
    %1394 = vrot.lane.b32.xlu0 %v1284, 126
    %v1395 = vpop.permute.xlu0 %1394
    %v1398 = vsel %vm65, %v1285, 0
    %v1401 = vsel %vm65, %v1286, 0
    %v1404 = vsel %vm65, %v1287, 0
    %v1407 = vsel %vm65, %v1288, 0
    %1409 = vmatprep.subr.mxu0 0.0
    %1410 = vmatpush1.msra.mxu0 %v1395
    %1411 = vmatprep.subr.mxu0 0.0
    %1412 = vmatpush1.msra.mxu0 0.0
    %1413 = vmatprep.subr.mxu0 0.0
    %1414 = vmatpush1.msra.mxu0 0.0
    %1415 = vmatprep.subr.mxu0 0.0
    %1416 = vmatpush1.msra.mxu0 0.0
    %1417 = vmatprep.subr.mxu0 0.0
    %1418 = vmatpush1.msra.mxu0 0.0
    %1419 = vmatprep.subr.mxu0 0.0
    %1420 = vmatpush1.msra.mxu0 0.0
    %1421 = vmatprep.subr.mxu0 0.0
    %1422 = vmatpush1.msra.mxu0 0.0
    %1423 = vmatprep.subr.mxu0 0.0
    %1424 = vmatpush1.msra.mxu0 0.0
    %1425 = vmatprep.subr.mxu0 0.0
    %1426 = vmatpush1.msra.mxu0 0.0
    %1427 = vmatprep.subr.mxu0 0.0
    %1428 = vmatpush1.msra.mxu0 0.0
    %1429 = vmatprep.subr.mxu0 0.0
    %1430 = vmatpush1.msra.mxu0 0.0
    %1431 = vmatprep.subr.mxu0 0.0
    %1432 = vmatpush1.msra.mxu0 0.0
    %1433 = vmatprep.subr.mxu0 0.0
    %1434 = vmatpush1.msra.mxu0 0.0
    %1435 = vmatprep.subr.mxu0 0.0
    %1436 = vmatpush1.msra.mxu0 0.0
    %1437 = vmatprep.subr.mxu0 0.0
    %1438 = vmatpush1.msra.mxu0 0.0
    %1439 = vmatprep.subr.mxu0 0.0
    %1440 = vmatpush1.msra.mxu0 0.0
    %1441 = vmatprep.subr.mxu0 0.0
    %1442 = vmatpush1.msra.mxu0 0.0
    %1443 = vmatprep.subr.mxu0 0.0
    %1444 = vmatpush1.msra.mxu0 0.0
    %1445 = vmatprep.subr.mxu0 0.0
    %1446 = vmatpush1.msra.mxu0 0.0
    %1447 = vmatprep.subr.mxu0 0.0
    %1448 = vmatpush1.msra.mxu0 0.0
    %1449 = vmatprep.subr.mxu0 0.0
    %1450 = vmatpush1.msra.mxu0 0.0
    %1451 = vmatprep.subr.mxu0 0.0
    %1452 = vmatpush1.msra.mxu0 0.0
    %1453 = vmatprep.subr.mxu0 0.0
    %1454 = vmatpush1.msra.mxu0 0.0
    %1455 = vmatprep.subr.mxu0 0.0
    %1456 = vmatpush1.msra.mxu0 0.0
    %1457 = vmatprep.subr.mxu0 0.0
    %1458 = vmatpush1.msra.mxu0 0.0
    %1459 = vmatprep.subr.mxu0 0.0
    %1460 = vmatpush1.msra.mxu0 0.0
    %1461 = vmatprep.subr.mxu0 0.0
    %1462 = vmatpush1.msra.mxu0 0.0
    %1463 = vmatprep.subr.mxu0 0.0
    %1464 = vmatpush1.msra.mxu0 0.0
    %1465 = vmatprep.subr.mxu0 0.0
    %1466 = vmatpush1.msra.mxu0 0.0
    %1467 = vmatprep.subr.mxu0 0.0
    %1468 = vmatpush1.msra.mxu0 0.0
    %1469 = vmatprep.subr.mxu0 0.0
    %1470 = vmatpush1.msra.mxu0 0.0
    %1471 = vmatprep.subr.mxu0 0.0
    %1472 = vmatpush1.msra.mxu0 0.0
    %1473 = vmatprep.mubr.f32.mxu0 0.0
    %1474 = vmatmul.mubr.f32.gmra.mrb[0].mxu0 %v1398
    %v1475 = vpop.f32.mrb[0].mxu0
    %v1476 = vadd.f32 %v1376, %v1475
    %v1477 = vpop.f32.mrb[0].mxu0
    %1478 = vmatprep.mubr.f32.mxu0 0.0
    %1479 = vmatmul.mubr.f32.gmra.mrb[0].mxu0 %v1401
    %v1480 = vpop.f32.mrb[0].mxu0
    %v1481 = vadd.f32 %v1381, %v1480
    %v1482 = vpop.f32.mrb[0].mxu0
    %1483 = vmatprep.mubr.f32.mxu0 0.0
    %1484 = vmatmul.mubr.f32.gmra.mrb[0].mxu0 %v1404
    %v1485 = vpop.f32.mrb[0].mxu0
    %v1486 = vadd.f32 %v1386, %v1485
    %v1487 = vpop.f32.mrb[0].mxu0
    %1488 = vmatprep.mubr.f32.mxu0 0.0
    %1489 = vmatmul.mubr.f32.gmra.mrb[0].mxu0 %v1407
    %v1490 = vpop.f32.mrb[0].mxu0
    %v1491 = vadd.f32 %v1391, %v1490
    %v1492 = vpop.f32.mrb[0].mxu0
    %1493 = vdwg.mxu0
    %v1494 = vld [vmem:[#allocation6 + $0x40] sm:$0xff]
    %v1495 = vld [vmem:[#allocation6 + $0x48] sm:$0xff]
    %v1496 = vld [vmem:[#allocation6 + $0x50] sm:$0xff]
    %v1497 = vld [vmem:[#allocation6 + $0x58] sm:$0xff]
    %1498 = vrot.lane.b32.xlu0 %v1284, 124
    %v1499 = vpop.permute.xlu0 %1498
    %v1502 = vsel %vm65, %v1494, 0
    %v1505 = vsel %vm65, %v1495, 0
    %v1508 = vsel %vm65, %v1496, 0
    %v1511 = vsel %vm65, %v1497, 0
    %1513 = vmatprep.subr.mxu0 0.0
    %1514 = vmatpush1.msra.mxu0 %v1499
    %1515 = vmatprep.subr.mxu0 0.0
    %1516 = vmatpush1.msra.mxu0 0.0
    %1517 = vmatprep.subr.mxu0 0.0
    %1518 = vmatpush1.msra.mxu0 0.0
    %1519 = vmatprep.subr.mxu0 0.0
    %1520 = vmatpush1.msra.mxu0 0.0
    %1521 = vmatprep.subr.mxu0 0.0
    %1522 = vmatpush1.msra.mxu0 0.0
    %1523 = vmatprep.subr.mxu0 0.0
    %1524 = vmatpush1.msra.mxu0 0.0
    %1525 = vmatprep.subr.mxu0 0.0
    %1526 = vmatpush1.msra.mxu0 0.0
    %1527 = vmatprep.subr.mxu0 0.0
    %1528 = vmatpush1.msra.mxu0 0.0
    %1529 = vmatprep.subr.mxu0 0.0
    %1530 = vmatpush1.msra.mxu0 0.0
    %1531 = vmatprep.subr.mxu0 0.0
    %1532 = vmatpush1.msra.mxu0 0.0
    %1533 = vmatprep.subr.mxu0 0.0
    %1534 = vmatpush1.msra.mxu0 0.0
    %1535 = vmatprep.subr.mxu0 0.0
    %1536 = vmatpush1.msra.mxu0 0.0
    %1537 = vmatprep.subr.mxu0 0.0
    %1538 = vmatpush1.msra.mxu0 0.0
    %1539 = vmatprep.subr.mxu0 0.0
    %1540 = vmatpush1.msra.mxu0 0.0
    %1541 = vmatprep.subr.mxu0 0.0
    %1542 = vmatpush1.msra.mxu0 0.0
    %1543 = vmatprep.subr.mxu0 0.0
    %1544 = vmatpush1.msra.mxu0 0.0
    %1545 = vmatprep.subr.mxu0 0.0
    %1546 = vmatpush1.msra.mxu0 0.0
    %1547 = vmatprep.subr.mxu0 0.0
    %1548 = vmatpush1.msra.mxu0 0.0
    %1549 = vmatprep.subr.mxu0 0.0
    %1550 = vmatpush1.msra.mxu0 0.0
    %1551 = vmatprep.subr.mxu0 0.0
    %1552 = vmatpush1.msra.mxu0 0.0
    %1553 = vmatprep.subr.mxu0 0.0
    %1554 = vmatpush1.msra.mxu0 0.0
    %1555 = vmatprep.subr.mxu0 0.0
    %1556 = vmatpush1.msra.mxu0 0.0
    %1557 = vmatprep.subr.mxu0 0.0
    %1558 = vmatpush1.msra.mxu0 0.0
    %1559 = vmatprep.subr.mxu0 0.0
    %1560 = vmatpush1.msra.mxu0 0.0
    %1561 = vmatprep.subr.mxu0 0.0
    %1562 = vmatpush1.msra.mxu0 0.0
    %1563 = vmatprep.subr.mxu0 0.0
    %1564 = vmatpush1.msra.mxu0 0.0
    %1565 = vmatprep.subr.mxu0 0.0
    %1566 = vmatpush1.msra.mxu0 0.0
    %1567 = vmatprep.subr.mxu0 0.0
    %1568 = vmatpush1.msra.mxu0 0.0
    %1569 = vmatprep.subr.mxu0 0.0
    %1570 = vmatpush1.msra.mxu0 0.0
    %1571 = vmatprep.subr.mxu0 0.0
    %1572 = vmatpush1.msra.mxu0 0.0
    %1573 = vmatprep.subr.mxu0 0.0
    %1574 = vmatpush1.msra.mxu0 0.0
    %1575 = vmatprep.subr.mxu0 0.0
    %1576 = vmatpush1.msra.mxu0 0.0
    %1577 = vmatprep.mubr.f32.mxu0 0.0
    %1578 = vmatmul.mubr.f32.gmra.mrb[0].mxu0 %v1502
    %v1579 = vpop.f32.mrb[0].mxu0
    %v1580 = vadd.f32 0.0, %v1579
    %v1581 = vpop.f32.mrb[0].mxu0
    %1582 = vmatprep.mubr.f32.mxu0 0.0
    %1583 = vmatmul.mubr.f32.gmra.mrb[0].mxu0 %v1505
    %v1584 = vpop.f32.mrb[0].mxu0
    %v1585 = vadd.f32 0.0, %v1584
    %v1586 = vpop.f32.mrb[0].mxu0
    %1587 = vmatprep.mubr.f32.mxu0 0.0
    %1588 = vmatmul.mubr.f32.gmra.mrb[0].mxu0 %v1508
    %v1589 = vpop.f32.mrb[0].mxu0
    %v1590 = vadd.f32 0.0, %v1589
    %v1591 = vpop.f32.mrb[0].mxu0
    %1592 = vmatprep.mubr.f32.mxu0 0.0
    %1593 = vmatmul.mubr.f32.gmra.mrb[0].mxu0 %v1511
    %v1594 = vpop.f32.mrb[0].mxu0
    %v1595 = vadd.f32 0.0, %v1594
    %v1596 = vpop.f32.mrb[0].mxu0
    %1597 = vdwg.mxu0
    %v1598 = vadd.f32 %v1476, %v1580
    %v1599 = vadd.f32 %v1481, %v1585
    %v1600 = vadd.f32 %v1486, %v1590
    %v1601 = vadd.f32 %v1491, %v1595
    %1602 = vset.pattern.permute.xlu0 8
    %1603 = vperm.xlu0 %1602, %v1285
    %v1604 = vpop.permute.xlu0 %1603
    %1606 = vset.pattern.permute.xlu0 8
    %1607 = vperm.xlu0 %1606, %v1286
    %v1608 = vpop.permute.xlu0 %1607
    %1610 = vset.pattern.permute.xlu0 8
    %1611 = vperm.xlu0 %1610, %v1287
    %v1612 = vpop.permute.xlu0 %1611
    %1614 = vset.pattern.permute.xlu0 8
    %1615 = vperm.xlu0 %1614, %v1288
    %v1616 = vpop.permute.xlu0 %1615
    %v1618 = vadd.f32 %v1598, %v1604
    %v1619 = vadd.f32 %v1599, %v1608
    %v1620 = vadd.f32 %v1600, %v1612
    %v1621 = vadd.f32 %v1601, %v1616
    %v1622 = vmax.f32 %v1618, 0.0
    %v1623 = vmax.f32 %v1619, 0.0
    %1626 = vrot.lane.b32.xlu0 %v1622, 4
    %v1627 = vpop.permute.xlu0 %1626
    %1628 = vrot.lane.b32.xlu0 %v1623, 4
    %v1629 = vpop.permute.xlu0 %1628
    %1632 = vst.msk [vmem:[#allocation2 + $0x10] sm:$0xff] %vm50, %v1627
    %1633 = vst.msk [vmem:[#allocation2 + $0x18] sm:$0xff] %vm50, %v1629
    %v1634 = vld [vmem:[#allocation2 + $0x10] sm:$0xff]
    %v1635 = vld [vmem:[#allocation2 + $0x18] sm:$0xff]
    %v1636 = vld [vmem:[#allocation6 + $0x60] sm:$0xff]
    %v1637 = vld [vmem:[#allocation6 + $0x68] sm:$0xff]
    %v1638 = vld [vmem:[#allocation6 + $0x70] sm:$0xff]
    %v1639 = vld [vmem:[#allocation6 + $0x78] sm:$0xff]
    %1642 = vrot.lane.b32.xlu0 %v1634, 125
    %v1643 = vpop.permute.xlu0 %1642
    %1644 = vrot.lane.b32.xlu0 %v1635, 125
    %v1645 = vpop.permute.xlu0 %1644
    %v1649 = vsel %vm417, %v1638, 0
    %v1652 = vsel %vm417, %v1639, 0
    %1654 = vmatprep.subr.mxu0 0.0
    %1655 = vmatpush1.msra.mxu0 %v1643
    %1656 = vmatprep.subr.mxu0 0.0
    %1657 = vmatpush1.msra.mxu0 %v1645
    %1658 = vmatprep.subr.mxu0 0.0
    %1659 = vmatpush1.msra.mxu0 0.0
    %1660 = vmatprep.subr.mxu0 0.0
    %1661 = vmatpush1.msra.mxu0 0.0
    %1662 = vmatprep.subr.mxu0 0.0
    %1663 = vmatpush1.msra.mxu0 0.0
    %1664 = vmatprep.subr.mxu0 0.0
    %1665 = vmatpush1.msra.mxu0 0.0
    %1666 = vmatprep.subr.mxu0 0.0
    %1667 = vmatpush1.msra.mxu0 0.0
    %1668 = vmatprep.subr.mxu0 0.0
    %1669 = vmatpush1.msra.mxu0 0.0
    %1670 = vmatprep.subr.mxu0 0.0
    %1671 = vmatpush1.msra.mxu0 0.0
    %1672 = vmatprep.subr.mxu0 0.0
    %1673 = vmatpush1.msra.mxu0 0.0
    %1674 = vmatprep.subr.mxu0 0.0
    %1675 = vmatpush1.msra.mxu0 0.0
    %1676 = vmatprep.subr.mxu0 0.0
    %1677 = vmatpush1.msra.mxu0 0.0
    %1678 = vmatprep.subr.mxu0 0.0
    %1679 = vmatpush1.msra.mxu0 0.0
    %1680 = vmatprep.subr.mxu0 0.0
    %1681 = vmatpush1.msra.mxu0 0.0
    %1682 = vmatprep.subr.mxu0 0.0
    %1683 = vmatpush1.msra.mxu0 0.0
    %1684 = vmatprep.subr.mxu0 0.0
    %1685 = vmatpush1.msra.mxu0 0.0
    %1686 = vmatprep.subr.mxu0 0.0
    %1687 = vmatpush1.msra.mxu0 0.0
    %1688 = vmatprep.subr.mxu0 0.0
    %1689 = vmatpush1.msra.mxu0 0.0
    %1690 = vmatprep.subr.mxu0 0.0
    %1691 = vmatpush1.msra.mxu0 0.0
    %1692 = vmatprep.subr.mxu0 0.0
    %1693 = vmatpush1.msra.mxu0 0.0
    %1694 = vmatprep.subr.mxu0 0.0
    %1695 = vmatpush1.msra.mxu0 0.0
    %1696 = vmatprep.subr.mxu0 0.0
    %1697 = vmatpush1.msra.mxu0 0.0
    %1698 = vmatprep.subr.mxu0 0.0
    %1699 = vmatpush1.msra.mxu0 0.0
    %1700 = vmatprep.subr.mxu0 0.0
    %1701 = vmatpush1.msra.mxu0 0.0
    %1702 = vmatprep.subr.mxu0 0.0
    %1703 = vmatpush1.msra.mxu0 0.0
    %1704 = vmatprep.subr.mxu0 0.0
    %1705 = vmatpush1.msra.mxu0 0.0
    %1706 = vmatprep.subr.mxu0 0.0
    %1707 = vmatpush1.msra.mxu0 0.0
    %1708 = vmatprep.subr.mxu0 0.0
    %1709 = vmatpush1.msra.mxu0 0.0
    %1710 = vmatprep.subr.mxu0 0.0
    %1711 = vmatpush1.msra.mxu0 0.0
    %1712 = vmatprep.subr.mxu0 0.0
    %1713 = vmatpush1.msra.mxu0 0.0
    %1714 = vmatprep.subr.mxu0 0.0
    %1715 = vmatpush1.msra.mxu0 0.0
    %1716 = vmatprep.subr.mxu0 0.0
    %1717 = vmatpush1.msra.mxu0 0.0
    %1718 = vmatprep.mubr.f32.mxu0 0.0
    %1719 = vmatmul.mubr.f32.gmra.mrb[0].mxu0 %v1649
    %v1720 = vpop.f32.mrb[0].mxu0
    %v1721 = vadd.f32 0.0, %v1720
    %v1722 = vpop.f32.mrb[0].mxu0
    %1723 = vmatprep.mubr.f32.mxu0 0.0
    %1724 = vmatmul.mubr.f32.gmra.mrb[0].mxu0 %v1652
    %v1725 = vpop.f32.mrb[0].mxu0
    %v1726 = vadd.f32 0.0, %v1725
    %v1727 = vpop.f32.mrb[0].mxu0
    %1728 = vdwg.mxu0
    %1729 = vrot.lane.b32.xlu0 %v1634, 126
    %v1730 = vpop.permute.xlu0 %1729
    %1731 = vrot.lane.b32.xlu0 %v1635, 126
    %v1732 = vpop.permute.xlu0 %1731
    %v1736 = vsel %vm417, %v1636, 0
    %v1739 = vsel %vm417, %v1637, 0
    %1741 = vmatprep.subr.mxu0 0.0
    %1742 = vmatpush1.msra.mxu0 %v1730
    %1743 = vmatprep.subr.mxu0 0.0
    %1744 = vmatpush1.msra.mxu0 %v1732
    %1745 = vmatprep.subr.mxu0 0.0
    %1746 = vmatpush1.msra.mxu0 0.0
    %1747 = vmatprep.subr.mxu0 0.0
    %1748 = vmatpush1.msra.mxu0 0.0
    %1749 = vmatprep.subr.mxu0 0.0
    %1750 = vmatpush1.msra.mxu0 0.0
    %1751 = vmatprep.subr.mxu0 0.0
    %1752 = vmatpush1.msra.mxu0 0.0
    %1753 = vmatprep.subr.mxu0 0.0
    %1754 = vmatpush1.msra.mxu0 0.0
    %1755 = vmatprep.subr.mxu0 0.0
    %1756 = vmatpush1.msra.mxu0 0.0
    %1757 = vmatprep.subr.mxu0 0.0
    %1758 = vmatpush1.msra.mxu0 0.0
    %1759 = vmatprep.subr.mxu0 0.0
    %1760 = vmatpush1.msra.mxu0 0.0
    %1761 = vmatprep.subr.mxu0 0.0
    %1762 = vmatpush1.msra.mxu0 0.0
    %1763 = vmatprep.subr.mxu0 0.0
    %1764 = vmatpush1.msra.mxu0 0.0
    %1765 = vmatprep.subr.mxu0 0.0
    %1766 = vmatpush1.msra.mxu0 0.0
    %1767 = vmatprep.subr.mxu0 0.0
    %1768 = vmatpush1.msra.mxu0 0.0
    %1769 = vmatprep.subr.mxu0 0.0
    %1770 = vmatpush1.msra.mxu0 0.0
    %1771 = vmatprep.subr.mxu0 0.0
    %1772 = vmatpush1.msra.mxu0 0.0
    %1773 = vmatprep.subr.mxu0 0.0
    %1774 = vmatpush1.msra.mxu0 0.0
    %1775 = vmatprep.subr.mxu0 0.0
    %1776 = vmatpush1.msra.mxu0 0.0
    %1777 = vmatprep.subr.mxu0 0.0
    %1778 = vmatpush1.msra.mxu0 0.0
    %1779 = vmatprep.subr.mxu0 0.0
    %1780 = vmatpush1.msra.mxu0 0.0
    %1781 = vmatprep.subr.mxu0 0.0
    %1782 = vmatpush1.msra.mxu0 0.0
    %1783 = vmatprep.subr.mxu0 0.0
    %1784 = vmatpush1.msra.mxu0 0.0
    %1785 = vmatprep.subr.mxu0 0.0
    %1786 = vmatpush1.msra.mxu0 0.0
    %1787 = vmatprep.subr.mxu0 0.0
    %1788 = vmatpush1.msra.mxu0 0.0
    %1789 = vmatprep.subr.mxu0 0.0
    %1790 = vmatpush1.msra.mxu0 0.0
    %1791 = vmatprep.subr.mxu0 0.0
    %1792 = vmatpush1.msra.mxu0 0.0
    %1793 = vmatprep.subr.mxu0 0.0
    %1794 = vmatpush1.msra.mxu0 0.0
    %1795 = vmatprep.subr.mxu0 0.0
    %1796 = vmatpush1.msra.mxu0 0.0
    %1797 = vmatprep.subr.mxu0 0.0
    %1798 = vmatpush1.msra.mxu0 0.0
    %1799 = vmatprep.subr.mxu0 0.0
    %1800 = vmatpush1.msra.mxu0 0.0
    %1801 = vmatprep.subr.mxu0 0.0
    %1802 = vmatpush1.msra.mxu0 0.0
    %1803 = vmatprep.subr.mxu0 0.0
    %1804 = vmatpush1.msra.mxu0 0.0
    %1805 = vmatprep.mubr.f32.mxu0 0.0
    %1806 = vmatmul.mubr.f32.gmra.mrb[0].mxu0 %v1736
    %v1807 = vpop.f32.mrb[0].mxu0
    %v1808 = vadd.f32 %v1721, %v1807
    %v1809 = vpop.f32.mrb[0].mxu0
    %1810 = vmatprep.mubr.f32.mxu0 0.0
    %1811 = vmatmul.mubr.f32.gmra.mrb[0].mxu0 %v1739
    %v1812 = vpop.f32.mrb[0].mxu0
    %v1813 = vadd.f32 %v1726, %v1812
    %v1814 = vpop.f32.mrb[0].mxu0
    %1815 = vdwg.mxu0
    %v1816 = vld [vmem:[#allocation6 + $0x80] sm:$0xff]
    %v1817 = vld [vmem:[#allocation6 + $0x88] sm:$0xff]
    %1818 = vrot.lane.b32.xlu0 %v1634, 124
    %v1819 = vpop.permute.xlu0 %1818
    %1820 = vrot.lane.b32.xlu0 %v1635, 124
    %v1821 = vpop.permute.xlu0 %1820
    %v1825 = vsel %vm417, %v1816, 0
    %v1828 = vsel %vm417, %v1817, 0
    %1830 = vmatprep.subr.mxu0 0.0
    %1831 = vmatpush1.msra.mxu0 %v1819
    %1832 = vmatprep.subr.mxu0 0.0
    %1833 = vmatpush1.msra.mxu0 %v1821
    %1834 = vmatprep.subr.mxu0 0.0
    %1835 = vmatpush1.msra.mxu0 0.0
    %1836 = vmatprep.subr.mxu0 0.0
    %1837 = vmatpush1.msra.mxu0 0.0
    %1838 = vmatprep.subr.mxu0 0.0
    %1839 = vmatpush1.msra.mxu0 0.0
    %1840 = vmatprep.subr.mxu0 0.0
    %1841 = vmatpush1.msra.mxu0 0.0
    %1842 = vmatprep.subr.mxu0 0.0
    %1843 = vmatpush1.msra.mxu0 0.0
    %1844 = vmatprep.subr.mxu0 0.0
    %1845 = vmatpush1.msra.mxu0 0.0
    %1846 = vmatprep.subr.mxu0 0.0
    %1847 = vmatpush1.msra.mxu0 0.0
    %1848 = vmatprep.subr.mxu0 0.0
    %1849 = vmatpush1.msra.mxu0 0.0
    %1850 = vmatprep.subr.mxu0 0.0
    %1851 = vmatpush1.msra.mxu0 0.0
    %1852 = vmatprep.subr.mxu0 0.0
    %1853 = vmatpush1.msra.mxu0 0.0
    %1854 = vmatprep.subr.mxu0 0.0
    %1855 = vmatpush1.msra.mxu0 0.0
    %1856 = vmatprep.subr.mxu0 0.0
    %1857 = vmatpush1.msra.mxu0 0.0
    %1858 = vmatprep.subr.mxu0 0.0
    %1859 = vmatpush1.msra.mxu0 0.0
    %1860 = vmatprep.subr.mxu0 0.0
    %1861 = vmatpush1.msra.mxu0 0.0
    %1862 = vmatprep.subr.mxu0 0.0
    %1863 = vmatpush1.msra.mxu0 0.0
    %1864 = vmatprep.subr.mxu0 0.0
    %1865 = vmatpush1.msra.mxu0 0.0
    %1866 = vmatprep.subr.mxu0 0.0
    %1867 = vmatpush1.msra.mxu0 0.0
    %1868 = vmatprep.subr.mxu0 0.0
    %1869 = vmatpush1.msra.mxu0 0.0
    %1870 = vmatprep.subr.mxu0 0.0
    %1871 = vmatpush1.msra.mxu0 0.0
    %1872 = vmatprep.subr.mxu0 0.0
    %1873 = vmatpush1.msra.mxu0 0.0
    %1874 = vmatprep.subr.mxu0 0.0
    %1875 = vmatpush1.msra.mxu0 0.0
    %1876 = vmatprep.subr.mxu0 0.0
    %1877 = vmatpush1.msra.mxu0 0.0
    %1878 = vmatprep.subr.mxu0 0.0
    %1879 = vmatpush1.msra.mxu0 0.0
    %1880 = vmatprep.subr.mxu0 0.0
    %1881 = vmatpush1.msra.mxu0 0.0
    %1882 = vmatprep.subr.mxu0 0.0
    %1883 = vmatpush1.msra.mxu0 0.0
    %1884 = vmatprep.subr.mxu0 0.0
    %1885 = vmatpush1.msra.mxu0 0.0
    %1886 = vmatprep.subr.mxu0 0.0
    %1887 = vmatpush1.msra.mxu0 0.0
    %1888 = vmatprep.subr.mxu0 0.0
    %1889 = vmatpush1.msra.mxu0 0.0
    %1890 = vmatprep.subr.mxu0 0.0
    %1891 = vmatpush1.msra.mxu0 0.0
    %1892 = vmatprep.subr.mxu0 0.0
    %1893 = vmatpush1.msra.mxu0 0.0
    %1894 = vmatprep.mubr.f32.mxu0 0.0
    %1895 = vmatmul.mubr.f32.gmra.mrb[0].mxu0 %v1825
    %v1896 = vpop.f32.mrb[0].mxu0
    %v1897 = vadd.f32 0.0, %v1896
    %v1898 = vpop.f32.mrb[0].mxu0
    %1899 = vmatprep.mubr.f32.mxu0 0.0
    %1900 = vmatmul.mubr.f32.gmra.mrb[0].mxu0 %v1828
    %v1901 = vpop.f32.mrb[0].mxu0
    %v1902 = vadd.f32 0.0, %v1901
    %v1903 = vpop.f32.mrb[0].mxu0
    %1904 = vdwg.mxu0
    %v1905 = vadd.f32 %v1808, %v1897
    %v1906 = vadd.f32 %v1813, %v1902
    %1907 = vset.pattern.permute.xlu0 16
    %1908 = vperm.xlu0 %1907, %v1636
    %v1909 = vpop.permute.xlu0 %1908
    %1911 = vset.pattern.permute.xlu0 16
    %1912 = vperm.xlu0 %1911, %v1637
    %v1913 = vpop.permute.xlu0 %1912
    %v1915 = vadd.f32 %v1905, %v1909
    %v1916 = vadd.f32 %v1906, %v1913
    %v1917 = vmax.f32 %v1915, 0.0
    %v1918 = vmax.f32 %v1916, 0.0
    %v1919 = vadd.f32 %v1917, %v1620
    %v1920 = vadd.f32 %v1918, %v1621
    %v1921 = vmax.f32 %v1919, 0.0
    %v1922 = vmax.f32 %v1920, 0.0
    %1925 = vrot.lane.b32.xlu0 %v1921, 4
    %v1926 = vpop.permute.xlu0 %1925
    %1927 = vrot.lane.b32.xlu0 %v1922, 4
    %v1928 = vpop.permute.xlu0 %1927
    %1931 = vst.msk [vmem:[#allocation2 + $0x10] sm:$0xff] %vm50, %v1926
    %1932 = vst.msk [vmem:[#allocation2 + $0x18] sm:$0xff] %vm50, %v1928
    %v1933 = vld [vmem:[#allocation2 + $0x10] sm:$0xff]
    %v1934 = vld [vmem:[#allocation2 + $0x18] sm:$0xff]
    %v1935 = vld [vmem:[#allocation6 + $0x90] sm:$0xff]
    %v1936 = vld [vmem:[#allocation6 + $0x98] sm:$0xff]
    %v1937 = vld [vmem:[#allocation6 + $0xa0] sm:$0xff]
    %v1938 = vld [vmem:[#allocation6 + $0xa8] sm:$0xff]
    %1941 = vrot.lane.b32.xlu0 %v1933, 126
    %v1942 = vpop.permute.xlu0 %1941
    %1943 = vrot.lane.b32.xlu0 %v1934, 126
    %v1944 = vpop.permute.xlu0 %1943
    %v1948 = vsel %vm417, %v1937, 0
    %v1951 = vsel %vm417, %v1938, 0
    %1953 = vmatprep.subr.mxu0 0.0
    %1954 = vmatpush1.msra.mxu0 %v1942
    %1955 = vmatprep.subr.mxu0 0.0
    %1956 = vmatpush1.msra.mxu0 %v1944
    %1957 = vmatprep.subr.mxu0 0.0
    %1958 = vmatpush1.msra.mxu0 0.0
    %1959 = vmatprep.subr.mxu0 0.0
    %1960 = vmatpush1.msra.mxu0 0.0
    %1961 = vmatprep.subr.mxu0 0.0
    %1962 = vmatpush1.msra.mxu0 0.0
    %1963 = vmatprep.subr.mxu0 0.0
    %1964 = vmatpush1.msra.mxu0 0.0
    %1965 = vmatprep.subr.mxu0 0.0
    %1966 = vmatpush1.msra.mxu0 0.0
    %1967 = vmatprep.subr.mxu0 0.0
    %1968 = vmatpush1.msra.mxu0 0.0
    %1969 = vmatprep.subr.mxu0 0.0
    %1970 = vmatpush1.msra.mxu0 0.0
    %1971 = vmatprep.subr.mxu0 0.0
    %1972 = vmatpush1.msra.mxu0 0.0
    %1973 = vmatprep.subr.mxu0 0.0
    %1974 = vmatpush1.msra.mxu0 0.0
    %1975 = vmatprep.subr.mxu0 0.0
    %1976 = vmatpush1.msra.mxu0 0.0
    %1977 = vmatprep.subr.mxu0 0.0
    %1978 = vmatpush1.msra.mxu0 0.0
    %1979 = vmatprep.subr.mxu0 0.0
    %1980 = vmatpush1.msra.mxu0 0.0
    %1981 = vmatprep.subr.mxu0 0.0
    %1982 = vmatpush1.msra.mxu0 0.0
    %1983 = vmatprep.subr.mxu0 0.0
    %1984 = vmatpush1.msra.mxu0 0.0
    %1985 = vmatprep.subr.mxu0 0.0
    %1986 = vmatpush1.msra.mxu0 0.0
    %1987 = vmatprep.subr.mxu0 0.0
    %1988 = vmatpush1.msra.mxu0 0.0
    %1989 = vmatprep.subr.mxu0 0.0
    %1990 = vmatpush1.msra.mxu0 0.0
    %1991 = vmatprep.subr.mxu0 0.0
    %1992 = vmatpush1.msra.mxu0 0.0
    %1993 = vmatprep.subr.mxu0 0.0
    %1994 = vmatpush1.msra.mxu0 0.0
    %1995 = vmatprep.subr.mxu0 0.0
    %1996 = vmatpush1.msra.mxu0 0.0
    %1997 = vmatprep.subr.mxu0 0.0
    %1998 = vmatpush1.msra.mxu0 0.0
    %1999 = vmatprep.subr.mxu0 0.0
    %2000 = vmatpush1.msra.mxu0 0.0
    %2001 = vmatprep.subr.mxu0 0.0
    %2002 = vmatpush1.msra.mxu0 0.0
    %2003 = vmatprep.subr.mxu0 0.0
    %2004 = vmatpush1.msra.mxu0 0.0
    %2005 = vmatprep.subr.mxu0 0.0
    %2006 = vmatpush1.msra.mxu0 0.0
    %2007 = vmatprep.subr.mxu0 0.0
    %2008 = vmatpush1.msra.mxu0 0.0
    %2009 = vmatprep.subr.mxu0 0.0
    %2010 = vmatpush1.msra.mxu0 0.0
    %2011 = vmatprep.subr.mxu0 0.0
    %2012 = vmatpush1.msra.mxu0 0.0
    %2013 = vmatprep.subr.mxu0 0.0
    %2014 = vmatpush1.msra.mxu0 0.0
    %2015 = vmatprep.subr.mxu0 0.0
    %2016 = vmatpush1.msra.mxu0 0.0
    %2017 = vmatprep.mubr.f32.mxu0 0.0
    %2018 = vmatmul.mubr.f32.gmra.mrb[0].mxu0 %v1948
    %v2019 = vpop.f32.mrb[0].mxu0
    %v2020 = vadd.f32 0.0, %v2019
    %v2021 = vpop.f32.mrb[0].mxu0
    %2022 = vmatprep.mubr.f32.mxu0 0.0
    %2023 = vmatmul.mubr.f32.gmra.mrb[0].mxu0 %v1951
    %v2024 = vpop.f32.mrb[0].mxu0
    %v2025 = vadd.f32 0.0, %v2024
    %v2026 = vpop.f32.mrb[0].mxu0
    %2027 = vdwg.mxu0
    %v2029 = vsel %vm417, %v1935, 0
    %v2032 = vsel %vm417, %v1936, 0
    %2034 = vmatprep.subr.mxu0 0.0
    %2035 = vmatpush1.msra.mxu0 %v1933
    %2036 = vmatprep.subr.mxu0 0.0
    %2037 = vmatpush1.msra.mxu0 %v1934
    %2038 = vmatprep.subr.mxu0 0.0
    %2039 = vmatpush1.msra.mxu0 0.0
    %2040 = vmatprep.subr.mxu0 0.0
    %2041 = vmatpush1.msra.mxu0 0.0
    %2042 = vmatprep.subr.mxu0 0.0
    %2043 = vmatpush1.msra.mxu0 0.0
    %2044 = vmatprep.subr.mxu0 0.0
    %2045 = vmatpush1.msra.mxu0 0.0
    %2046 = vmatprep.subr.mxu0 0.0
    %2047 = vmatpush1.msra.mxu0 0.0
    %2048 = vmatprep.subr.mxu0 0.0
    %2049 = vmatpush1.msra.mxu0 0.0
    %2050 = vmatprep.subr.mxu0 0.0
    %2051 = vmatpush1.msra.mxu0 0.0
    %2052 = vmatprep.subr.mxu0 0.0
    %2053 = vmatpush1.msra.mxu0 0.0
    %2054 = vmatprep.subr.mxu0 0.0
    %2055 = vmatpush1.msra.mxu0 0.0
    %2056 = vmatprep.subr.mxu0 0.0
    %2057 = vmatpush1.msra.mxu0 0.0
    %2058 = vmatprep.subr.mxu0 0.0
    %2059 = vmatpush1.msra.mxu0 0.0
    %2060 = vmatprep.subr.mxu0 0.0
    %2061 = vmatpush1.msra.mxu0 0.0
    %2062 = vmatprep.subr.mxu0 0.0
    %2063 = vmatpush1.msra.mxu0 0.0
    %2064 = vmatprep.subr.mxu0 0.0
    %2065 = vmatpush1.msra.mxu0 0.0
    %2066 = vmatprep.subr.mxu0 0.0
    %2067 = vmatpush1.msra.mxu0 0.0
    %2068 = vmatprep.subr.mxu0 0.0
    %2069 = vmatpush1.msra.mxu0 0.0
    %2070 = vmatprep.subr.mxu0 0.0
    %2071 = vmatpush1.msra.mxu0 0.0
    %2072 = vmatprep.subr.mxu0 0.0
    %2073 = vmatpush1.msra.mxu0 0.0
    %2074 = vmatprep.subr.mxu0 0.0
    %2075 = vmatpush1.msra.mxu0 0.0
    %2076 = vmatprep.subr.mxu0 0.0
    %2077 = vmatpush1.msra.mxu0 0.0
    %2078 = vmatprep.subr.mxu0 0.0
    %2079 = vmatpush1.msra.mxu0 0.0
    %2080 = vmatprep.subr.mxu0 0.0
    %2081 = vmatpush1.msra.mxu0 0.0
    %2082 = vmatprep.subr.mxu0 0.0
    %2083 = vmatpush1.msra.mxu0 0.0
    %2084 = vmatprep.subr.mxu0 0.0
    %2085 = vmatpush1.msra.mxu0 0.0
    %2086 = vmatprep.subr.mxu0 0.0
    %2087 = vmatpush1.msra.mxu0 0.0
    %2088 = vmatprep.subr.mxu0 0.0
    %2089 = vmatpush1.msra.mxu0 0.0
    %2090 = vmatprep.subr.mxu0 0.0
    %2091 = vmatpush1.msra.mxu0 0.0
    %2092 = vmatprep.subr.mxu0 0.0
    %2093 = vmatpush1.msra.mxu0 0.0
    %2094 = vmatprep.subr.mxu0 0.0
    %2095 = vmatpush1.msra.mxu0 0.0
    %2096 = vmatprep.subr.mxu0 0.0
    %2097 = vmatpush1.msra.mxu0 0.0
    %2098 = vmatprep.mubr.f32.mxu0 0.0
    %2099 = vmatmul.mubr.f32.gmra.mrb[0].mxu0 %v2029
    %v2100 = vpop.f32.mrb[0].mxu0
    %v2101 = vadd.f32 %v2020, %v2100
    %v2102 = vpop.f32.mrb[0].mxu0
    %2103 = vmatprep.mubr.f32.mxu0 0.0
    %2104 = vmatmul.mubr.f32.gmra.mrb[0].mxu0 %v2032
    %v2105 = vpop.f32.mrb[0].mxu0
    %v2106 = vadd.f32 %v2025, %v2105
    %v2107 = vpop.f32.mrb[0].mxu0
    %2108 = vdwg.mxu0
    %v2109 = vld [vmem:[#allocation6 + $0xb0] sm:$0xff]
    %v2110 = vld [vmem:[#allocation6 + $0xb8] sm:$0xff]
    %2111 = vrot.lane.b32.xlu0 %v1933, 124
    %v2112 = vpop.permute.xlu0 %2111
    %2113 = vrot.lane.b32.xlu0 %v1934, 124
    %v2114 = vpop.permute.xlu0 %2113
    %v2118 = vsel %vm417, %v2109, 0
    %v2121 = vsel %vm417, %v2110, 0
    %2123 = vmatprep.subr.mxu0 0.0
    %2124 = vmatpush1.msra.mxu0 %v2112
    %2125 = vmatprep.subr.mxu0 0.0
    %2126 = vmatpush1.msra.mxu0 %v2114
    %2127 = vmatprep.subr.mxu0 0.0
    %2128 = vmatpush1.msra.mxu0 0.0
    %2129 = vmatprep.subr.mxu0 0.0
    %2130 = vmatpush1.msra.mxu0 0.0
    %2131 = vmatprep.subr.mxu0 0.0
    %2132 = vmatpush1.msra.mxu0 0.0
    %2133 = vmatprep.subr.mxu0 0.0
    %2134 = vmatpush1.msra.mxu0 0.0
    %2135 = vmatprep.subr.mxu0 0.0
    %2136 = vmatpush1.msra.mxu0 0.0
    %2137 = vmatprep.subr.mxu0 0.0
    %2138 = vmatpush1.msra.mxu0 0.0
    %2139 = vmatprep.subr.mxu0 0.0
    %2140 = vmatpush1.msra.mxu0 0.0
    %2141 = vmatprep.subr.mxu0 0.0
    %2142 = vmatpush1.msra.mxu0 0.0
    %2143 = vmatprep.subr.mxu0 0.0
    %2144 = vmatpush1.msra.mxu0 0.0
    %2145 = vmatprep.subr.mxu0 0.0
    %2146 = vmatpush1.msra.mxu0 0.0
    %2147 = vmatprep.subr.mxu0 0.0
    %2148 = vmatpush1.msra.mxu0 0.0
    %2149 = vmatprep.subr.mxu0 0.0
    %2150 = vmatpush1.msra.mxu0 0.0
    %2151 = vmatprep.subr.mxu0 0.0
    %2152 = vmatpush1.msra.mxu0 0.0
    %2153 = vmatprep.subr.mxu0 0.0
    %2154 = vmatpush1.msra.mxu0 0.0
    %2155 = vmatprep.subr.mxu0 0.0
    %2156 = vmatpush1.msra.mxu0 0.0
    %2157 = vmatprep.subr.mxu0 0.0
    %2158 = vmatpush1.msra.mxu0 0.0
    %2159 = vmatprep.subr.mxu0 0.0
    %2160 = vmatpush1.msra.mxu0 0.0
    %2161 = vmatprep.subr.mxu0 0.0
    %2162 = vmatpush1.msra.mxu0 0.0
    %2163 = vmatprep.subr.mxu0 0.0
    %2164 = vmatpush1.msra.mxu0 0.0
    %2165 = vmatprep.subr.mxu0 0.0
    %2166 = vmatpush1.msra.mxu0 0.0
    %2167 = vmatprep.subr.mxu0 0.0
    %2168 = vmatpush1.msra.mxu0 0.0
    %2169 = vmatprep.subr.mxu0 0.0
    %2170 = vmatpush1.msra.mxu0 0.0
    %2171 = vmatprep.subr.mxu0 0.0
    %2172 = vmatpush1.msra.mxu0 0.0
    %2173 = vmatprep.subr.mxu0 0.0
    %2174 = vmatpush1.msra.mxu0 0.0
    %2175 = vmatprep.subr.mxu0 0.0
    %2176 = vmatpush1.msra.mxu0 0.0
    %2177 = vmatprep.subr.mxu0 0.0
    %2178 = vmatpush1.msra.mxu0 0.0
    %2179 = vmatprep.subr.mxu0 0.0
    %2180 = vmatpush1.msra.mxu0 0.0
    %2181 = vmatprep.subr.mxu0 0.0
    %2182 = vmatpush1.msra.mxu0 0.0
    %2183 = vmatprep.subr.mxu0 0.0
    %2184 = vmatpush1.msra.mxu0 0.0
    %2185 = vmatprep.subr.mxu0 0.0
    %2186 = vmatpush1.msra.mxu0 0.0
    %2187 = vmatprep.mubr.f32.mxu0 0.0
    %2188 = vmatmul.mubr.f32.gmra.mrb[0].mxu0 %v2118
    %v2189 = vpop.f32.mrb[0].mxu0
    %v2190 = vadd.f32 0.0, %v2189
    %v2191 = vpop.f32.mrb[0].mxu0
    %2192 = vmatprep.mubr.f32.mxu0 0.0
    %2193 = vmatmul.mubr.f32.gmra.mrb[0].mxu0 %v2121
    %v2194 = vpop.f32.mrb[0].mxu0
    %v2195 = vadd.f32 0.0, %v2194
    %v2196 = vpop.f32.mrb[0].mxu0
    %2197 = vdwg.mxu0
    %v2198 = vadd.f32 %v2101, %v2190
    %v2199 = vadd.f32 %v2106, %v2195
    %2200 = vset.pattern.permute.xlu0 16
    %2201 = vperm.xlu0 %2200, %v1935
    %v2202 = vpop.permute.xlu0 %2201
    %2204 = vset.pattern.permute.xlu0 16
    %2205 = vperm.xlu0 %2204, %v1936
    %v2206 = vpop.permute.xlu0 %2205
    %v2208 = vadd.f32 %v2198, %v2202
    %v2209 = vadd.f32 %v2199, %v2206
    %v2210 = vmax.f32 %v2208, 0.0
    %v2211 = vmax.f32 %v2209, 0.0
    %2214 = vrot.lane.b32.xlu0 %v2210, 4
    %v2215 = vpop.permute.xlu0 %2214
    %2216 = vrot.lane.b32.xlu0 %v2211, 4
    %v2217 = vpop.permute.xlu0 %2216
    %2220 = vst.msk [vmem:[#allocation2 + $0x10] sm:$0xff] %vm50, %v2215
    %2221 = vst.msk [vmem:[#allocation2 + $0x18] sm:$0xff] %vm50, %v2217
    %v2222 = vld [vmem:[#allocation2 + $0x10] sm:$0xff]
    %v2223 = vld [vmem:[#allocation2 + $0x18] sm:$0xff]
    %v2224 = vld [vmem:[#allocation6 + $0xc0] sm:$0xff]
    %v2225 = vld [vmem:[#allocation6 + $0xc8] sm:$0xff]
    %v2226 = vld [vmem:[#allocation6 + $0xd0] sm:$0xff]
    %v2227 = vld [vmem:[#allocation6 + $0xd8] sm:$0xff]
    %2230 = vrot.lane.b32.xlu0 %v2222, 126
    %v2231 = vpop.permute.xlu0 %2230
    %2232 = vrot.lane.b32.xlu0 %v2223, 126
    %v2233 = vpop.permute.xlu0 %2232
    %v2237 = vsel %vm417, %v2226, 0
    %v2240 = vsel %vm417, %v2227, 0
    %2242 = vmatprep.subr.mxu0 0.0
    %2243 = vmatpush1.msra.mxu0 %v2231
    %2244 = vmatprep.subr.mxu0 0.0
    %2245 = vmatpush1.msra.mxu0 %v2233
    %2246 = vmatprep.subr.mxu0 0.0
    %2247 = vmatpush1.msra.mxu0 0.0
    %2248 = vmatprep.subr.mxu0 0.0
    %2249 = vmatpush1.msra.mxu0 0.0
    %2250 = vmatprep.subr.mxu0 0.0
    %2251 = vmatpush1.msra.mxu0 0.0
    %2252 = vmatprep.subr.mxu0 0.0
    %2253 = vmatpush1.msra.mxu0 0.0
    %2254 = vmatprep.subr.mxu0 0.0
    %2255 = vmatpush1.msra.mxu0 0.0
    %2256 = vmatprep.subr.mxu0 0.0
    %2257 = vmatpush1.msra.mxu0 0.0
    %2258 = vmatprep.subr.mxu0 0.0
    %2259 = vmatpush1.msra.mxu0 0.0
    %2260 = vmatprep.subr.mxu0 0.0
    %2261 = vmatpush1.msra.mxu0 0.0
    %2262 = vmatprep.subr.mxu0 0.0
    %2263 = vmatpush1.msra.mxu0 0.0
    %2264 = vmatprep.subr.mxu0 0.0
    %2265 = vmatpush1.msra.mxu0 0.0
    %2266 = vmatprep.subr.mxu0 0.0
    %2267 = vmatpush1.msra.mxu0 0.0
    %2268 = vmatprep.subr.mxu0 0.0
    %2269 = vmatpush1.msra.mxu0 0.0
    %2270 = vmatprep.subr.mxu0 0.0
    %2271 = vmatpush1.msra.mxu0 0.0
    %2272 = vmatprep.subr.mxu0 0.0
    %2273 = vmatpush1.msra.mxu0 0.0
    %2274 = vmatprep.subr.mxu0 0.0
    %2275 = vmatpush1.msra.mxu0 0.0
    %2276 = vmatprep.subr.mxu0 0.0
    %2277 = vmatpush1.msra.mxu0 0.0
    %2278 = vmatprep.subr.mxu0 0.0
    %2279 = vmatpush1.msra.mxu0 0.0
    %2280 = vmatprep.subr.mxu0 0.0
    %2281 = vmatpush1.msra.mxu0 0.0
    %2282 = vmatprep.subr.mxu0 0.0
    %2283 = vmatpush1.msra.mxu0 0.0
    %2284 = vmatprep.subr.mxu0 0.0
    %2285 = vmatpush1.msra.mxu0 0.0
    %2286 = vmatprep.subr.mxu0 0.0
    %2287 = vmatpush1.msra.mxu0 0.0
    %2288 = vmatprep.subr.mxu0 0.0
    %2289 = vmatpush1.msra.mxu0 0.0
    %2290 = vmatprep.subr.mxu0 0.0
    %2291 = vmatpush1.msra.mxu0 0.0
    %2292 = vmatprep.subr.mxu0 0.0
    %2293 = vmatpush1.msra.mxu0 0.0
    %2294 = vmatprep.subr.mxu0 0.0
    %2295 = vmatpush1.msra.mxu0 0.0
    %2296 = vmatprep.subr.mxu0 0.0
    %2297 = vmatpush1.msra.mxu0 0.0
    %2298 = vmatprep.subr.mxu0 0.0
    %2299 = vmatpush1.msra.mxu0 0.0
    %2300 = vmatprep.subr.mxu0 0.0
    %2301 = vmatpush1.msra.mxu0 0.0
    %2302 = vmatprep.subr.mxu0 0.0
    %2303 = vmatpush1.msra.mxu0 0.0
    %2304 = vmatprep.subr.mxu0 0.0
    %2305 = vmatpush1.msra.mxu0 0.0
    %2306 = vmatprep.mubr.f32.mxu0 0.0
    %2307 = vmatmul.mubr.f32.gmra.mrb[0].mxu0 %v2237
    %v2308 = vpop.f32.mrb[0].mxu0
    %v2309 = vadd.f32 0.0, %v2308
    %v2310 = vpop.f32.mrb[0].mxu0
    %2311 = vmatprep.mubr.f32.mxu0 0.0
    %2312 = vmatmul.mubr.f32.gmra.mrb[0].mxu0 %v2240
    %v2313 = vpop.f32.mrb[0].mxu0
    %v2314 = vadd.f32 0.0, %v2313
    %v2315 = vpop.f32.mrb[0].mxu0
    %2316 = vdwg.mxu0
    %v2318 = vsel %vm417, %v2224, 0
    %v2321 = vsel %vm417, %v2225, 0
    %2323 = vmatprep.subr.mxu0 0.0
    %2324 = vmatpush1.msra.mxu0 %v2222
    %2325 = vmatprep.subr.mxu0 0.0
    %2326 = vmatpush1.msra.mxu0 %v2223
    %2327 = vmatprep.subr.mxu0 0.0
    %2328 = vmatpush1.msra.mxu0 0.0
    %2329 = vmatprep.subr.mxu0 0.0
    %2330 = vmatpush1.msra.mxu0 0.0
    %2331 = vmatprep.subr.mxu0 0.0
    %2332 = vmatpush1.msra.mxu0 0.0
    %2333 = vmatprep.subr.mxu0 0.0
    %2334 = vmatpush1.msra.mxu0 0.0
    %2335 = vmatprep.subr.mxu0 0.0
    %2336 = vmatpush1.msra.mxu0 0.0
    %2337 = vmatprep.subr.mxu0 0.0
    %2338 = vmatpush1.msra.mxu0 0.0
    %2339 = vmatprep.subr.mxu0 0.0
    %2340 = vmatpush1.msra.mxu0 0.0
    %2341 = vmatprep.subr.mxu0 0.0
    %2342 = vmatpush1.msra.mxu0 0.0
    %2343 = vmatprep.subr.mxu0 0.0
    %2344 = vmatpush1.msra.mxu0 0.0
    %2345 = vmatprep.subr.mxu0 0.0
    %2346 = vmatpush1.msra.mxu0 0.0
    %2347 = vmatprep.subr.mxu0 0.0
    %2348 = vmatpush1.msra.mxu0 0.0
    %2349 = vmatprep.subr.mxu0 0.0
    %2350 = vmatpush1.msra.mxu0 0.0
    %2351 = vmatprep.subr.mxu0 0.0
    %2352 = vmatpush1.msra.mxu0 0.0
    %2353 = vmatprep.subr.mxu0 0.0
    %2354 = vmatpush1.msra.mxu0 0.0
    %2355 = vmatprep.subr.mxu0 0.0
    %2356 = vmatpush1.msra.mxu0 0.0
    %2357 = vmatprep.subr.mxu0 0.0
    %2358 = vmatpush1.msra.mxu0 0.0
    %2359 = vmatprep.subr.mxu0 0.0
    %2360 = vmatpush1.msra.mxu0 0.0
    %2361 = vmatprep.subr.mxu0 0.0
    %2362 = vmatpush1.msra.mxu0 0.0
    %2363 = vmatprep.subr.mxu0 0.0
    %2364 = vmatpush1.msra.mxu0 0.0
    %2365 = vmatprep.subr.mxu0 0.0
    %2366 = vmatpush1.msra.mxu0 0.0
    %2367 = vmatprep.subr.mxu0 0.0
    %2368 = vmatpush1.msra.mxu0 0.0
    %2369 = vmatprep.subr.mxu0 0.0
    %2370 = vmatpush1.msra.mxu0 0.0
    %2371 = vmatprep.subr.mxu0 0.0
    %2372 = vmatpush1.msra.mxu0 0.0
    %2373 = vmatprep.subr.mxu0 0.0
    %2374 = vmatpush1.msra.mxu0 0.0
    %2375 = vmatprep.subr.mxu0 0.0
    %2376 = vmatpush1.msra.mxu0 0.0
    %2377 = vmatprep.subr.mxu0 0.0
    %2378 = vmatpush1.msra.mxu0 0.0
    %2379 = vmatprep.subr.mxu0 0.0
    %2380 = vmatpush1.msra.mxu0 0.0
    %2381 = vmatprep.subr.mxu0 0.0
    %2382 = vmatpush1.msra.mxu0 0.0
    %2383 = vmatprep.subr.mxu0 0.0
    %2384 = vmatpush1.msra.mxu0 0.0
    %2385 = vmatprep.subr.mxu0 0.0
    %2386 = vmatpush1.msra.mxu0 0.0
    %2387 = vmatprep.mubr.f32.mxu0 0.0
    %2388 = vmatmul.mubr.f32.gmra.mrb[0].mxu0 %v2318
    %v2389 = vpop.f32.mrb[0].mxu0
    %v2390 = vadd.f32 %v2309, %v2389
    %v2391 = vpop.f32.mrb[0].mxu0
    %2392 = vmatprep.mubr.f32.mxu0 0.0
    %2393 = vmatmul.mubr.f32.gmra.mrb[0].mxu0 %v2321
    %v2394 = vpop.f32.mrb[0].mxu0
    %v2395 = vadd.f32 %v2314, %v2394
    %v2396 = vpop.f32.mrb[0].mxu0
    %2397 = vdwg.mxu0
    %v2398 = vld [vmem:[#allocation6 + $0xe0] sm:$0xff]
    %v2399 = vld [vmem:[#allocation6 + $0xe8] sm:$0xff]
    %2400 = vrot.lane.b32.xlu0 %v2222, 124
    %v2401 = vpop.permute.xlu0 %2400
    %2402 = vrot.lane.b32.xlu0 %v2223, 124
    %v2403 = vpop.permute.xlu0 %2402
    %v2407 = vsel %vm417, %v2398, 0
    %v2410 = vsel %vm417, %v2399, 0
    %2412 = vmatprep.subr.mxu0 0.0
    %2413 = vmatpush1.msra.mxu0 %v2401
    %2414 = vmatprep.subr.mxu0 0.0
    %2415 = vmatpush1.msra.mxu0 %v2403
    %2416 = vmatprep.subr.mxu0 0.0
    %2417 = vmatpush1.msra.mxu0 0.0
    %2418 = vmatprep.subr.mxu0 0.0
    %2419 = vmatpush1.msra.mxu0 0.0
    %2420 = vmatprep.subr.mxu0 0.0
    %2421 = vmatpush1.msra.mxu0 0.0
    %2422 = vmatprep.subr.mxu0 0.0
    %2423 = vmatpush1.msra.mxu0 0.0
    %2424 = vmatprep.subr.mxu0 0.0
    %2425 = vmatpush1.msra.mxu0 0.0
    %2426 = vmatprep.subr.mxu0 0.0
    %2427 = vmatpush1.msra.mxu0 0.0
    %2428 = vmatprep.subr.mxu0 0.0
    %2429 = vmatpush1.msra.mxu0 0.0
    %2430 = vmatprep.subr.mxu0 0.0
    %2431 = vmatpush1.msra.mxu0 0.0
    %2432 = vmatprep.subr.mxu0 0.0
    %2433 = vmatpush1.msra.mxu0 0.0
    %2434 = vmatprep.subr.mxu0 0.0
    %2435 = vmatpush1.msra.mxu0 0.0
    %2436 = vmatprep.subr.mxu0 0.0
    %2437 = vmatpush1.msra.mxu0 0.0
    %2438 = vmatprep.subr.mxu0 0.0
    %2439 = vmatpush1.msra.mxu0 0.0
    %2440 = vmatprep.subr.mxu0 0.0
    %2441 = vmatpush1.msra.mxu0 0.0
    %2442 = vmatprep.subr.mxu0 0.0
    %2443 = vmatpush1.msra.mxu0 0.0
    %2444 = vmatprep.subr.mxu0 0.0
    %2445 = vmatpush1.msra.mxu0 0.0
    %2446 = vmatprep.subr.mxu0 0.0
    %2447 = vmatpush1.msra.mxu0 0.0
    %2448 = vmatprep.subr.mxu0 0.0
    %2449 = vmatpush1.msra.mxu0 0.0
    %2450 = vmatprep.subr.mxu0 0.0
    %2451 = vmatpush1.msra.mxu0 0.0
    %2452 = vmatprep.subr.mxu0 0.0
    %2453 = vmatpush1.msra.mxu0 0.0
    %2454 = vmatprep.subr.mxu0 0.0
    %2455 = vmatpush1.msra.mxu0 0.0
    %2456 = vmatprep.subr.mxu0 0.0
    %2457 = vmatpush1.msra.mxu0 0.0
    %2458 = vmatprep.subr.mxu0 0.0
    %2459 = vmatpush1.msra.mxu0 0.0
    %2460 = vmatprep.subr.mxu0 0.0
    %2461 = vmatpush1.msra.mxu0 0.0
    %2462 = vmatprep.subr.mxu0 0.0
    %2463 = vmatpush1.msra.mxu0 0.0
    %2464 = vmatprep.subr.mxu0 0.0
    %2465 = vmatpush1.msra.mxu0 0.0
    %2466 = vmatprep.subr.mxu0 0.0
    %2467 = vmatpush1.msra.mxu0 0.0
    %2468 = vmatprep.subr.mxu0 0.0
    %2469 = vmatpush1.msra.mxu0 0.0
    %2470 = vmatprep.subr.mxu0 0.0
    %2471 = vmatpush1.msra.mxu0 0.0
    %2472 = vmatprep.subr.mxu0 0.0
    %2473 = vmatpush1.msra.mxu0 0.0
    %2474 = vmatprep.subr.mxu0 0.0
    %2475 = vmatpush1.msra.mxu0 0.0
    %2476 = vmatprep.mubr.f32.mxu0 0.0
    %2477 = vmatmul.mubr.f32.gmra.mrb[0].mxu0 %v2407
    %v2478 = vpop.f32.mrb[0].mxu0
    %v2479 = vadd.f32 0.0, %v2478
    %v2480 = vpop.f32.mrb[0].mxu0
    %2481 = vmatprep.mubr.f32.mxu0 0.0
    %2482 = vmatmul.mubr.f32.gmra.mrb[0].mxu0 %v2410
    %v2483 = vpop.f32.mrb[0].mxu0
    %v2484 = vadd.f32 0.0, %v2483
    %v2485 = vpop.f32.mrb[0].mxu0
    %2486 = vdwg.mxu0
    %v2487 = vadd.f32 %v2390, %v2479
    %v2488 = vadd.f32 %v2395, %v2484
    %2489 = vset.pattern.permute.xlu0 16
    %2490 = vperm.xlu0 %2489, %v2224
    %v2491 = vpop.permute.xlu0 %2490
    %2493 = vset.pattern.permute.xlu0 16
    %2494 = vperm.xlu0 %2493, %v2225
    %v2495 = vpop.permute.xlu0 %2494
    %v2497 = vadd.f32 %v2487, %v2491
    %v2498 = vadd.f32 %v2488, %v2495
    %v2499 = vmax.f32 %v2497, 0.0
    %v2500 = vmax.f32 %v2498, 0.0
    %v2501 = vadd.f32 %v2499, %v1921
    %v2502 = vadd.f32 %v2500, %v1922
    %v2503 = vmax.f32 %v2501, 0.0
    %v2504 = vmax.f32 %v2502, 0.0
    %s2505 = scalar_lea.vmem [#allocation8], 16
    %2506 = vst.msk [vmem:[%s2505] sm:$0xff] %vm417, %v2503
    %2507 = vst.msk [vmem:[%s2505 + $0x8] sm:$0xff] %vm417, %v2504
    // Predicated region
    $region18: #{tpu_custom_call.1} parent=1 // pred_check
      _
    $region19: #{tpu_custom_call.1} parent=1 // pred_check_branch
      %2509 = sbr.rel (0) target = $region21
    $region20: #{tpu_custom_call.1} parent=1 // pred_region
      %s2511 = ssub.s32 512, 512
      %2512 = vsyncadd [#allocation5], %s2511
      %s2513 = sshll.u32 [#allocation8], 4
      %s2514 = int_to_ptr.vmem [resolvable:$true] %s2513
      %2519 = dma.vmem_to_hbm [thread:$0]  %s2514, 512, %s2, [#allocation5], 128, 128, 8
    $region21: #{tpu_custom_call.1} parent=1 // pred_fallthru
      _
    // Predicated region
    $region22: #{tpu_custom_call.1} parent=1 // pred_check
      _
    $region23: #{tpu_custom_call.1} parent=1 // pred_check_branch
      %2521 = sbr.rel (0) target = $region25
    $region24: #{tpu_custom_call.1} parent=1 // pred_region
      %2522 = dma.done [#allocation5], 512
    $region25: #{tpu_custom_call.1} parent=1 // pred_fallthru
      _
    %2523 = vsyncpa [#allocation4], 1
    %2524 = vsyncpa [#allocation7], 1
    %2525 = vsyncpa [#allocation5], 1

</llo_original>
